<compile_context>
chip_gen: v7x
topology: tpu7x:2x2x1
jax: 0.10.0
libtpu: 0.0.40
codegen_flags: <defaults>
</compile_context>

<pallas_src>
import functools
import math

import jax
import jax.numpy as jnp
from jax.experimental import pallas as pl
from jax.experimental.pallas import tpu as pltpu


def _round_up(x, m):
    return (x + m - 1) // m * m


# ----------------------------------------------------------------------------
# Fused kernel: mean-aggregate + fused SAGE/residual linear + relu + layernorm
# ----------------------------------------------------------------------------

def _gnn_layer_kernel(adj_ref, xs_ref, xd_ref, invdeg_ref, w_ref, b_ref,
                      gamma_ref, beta_ref,
                      o_ref,
                      acc_ref,
                      *, out_valid, tile_src, xs_resident, eps):
    k = pl.program_id(1)

    @pl.when(k == 0)
    def _():
        acc_ref[...] = jnp.zeros_like(acc_ref)

    # --- neighbor-sum accumulation over source blocks (pure bf16 MXU, f32 acc) ---
    if xs_resident:
        # x (source rows) is fully VMEM-resident; slice the current source block.
        start = pl.multiple_of(k * tile_src, tile_src)
        xs = xs_ref[pl.ds(start, tile_src), :]
    else:
        xs = xs_ref[...]
    acc_ref[...] += jnp.dot(adj_ref[...], xs, preferred_element_type=jnp.float32)

    # --- epilogue on the last source block ---
    @pl.when(k == pl.num_programs(1) - 1)
    def _():
        # mean aggregation (1/deg precomputed in the wrapper, streamed per dest row)
        agg = (acc_ref[...] * invdeg_ref[...]).astype(jnp.bfloat16)   # (TM, Fin)
        xd = xd_ref[...]                                              # (TM, Fin) bf16

        # single K = 2*fin_pad matmul: [agg, x] @ [W_l ; W_r + W_p] + (b_l + b_p)
        z = jnp.concatenate([agg, xd], axis=-1)                       # (TM, 2*Fin)
        y = jnp.dot(z, w_ref[...], preferred_element_type=jnp.float32) + b_ref[...]
        y = jnp.maximum(y, 0.0)                                       # residual + ReLU

        # LayerNorm over the first `out_valid` real feature columns (rest is padding)
        fpad = y.shape[-1]
        inv_n = 1.0 / float(out_valid)
        if out_valid == fpad:
            mean = jnp.sum(y, axis=-1, keepdims=True) * inv_n
            var = jnp.sum((y - mean) ** 2, axis=-1, keepdims=True) * inv_n
        else:
            col = jax.lax.broadcasted_iota(jnp.int32, y.shape, 1)
            mask = (col < out_valid).astype(jnp.float32)
            mean = jnp.sum(y * mask, axis=-1, keepdims=True) * inv_n
            var = jnp.sum(((y - mean) * mask) ** 2, axis=-1, keepdims=True) * inv_n
        inv_std = jax.lax.rsqrt(var + eps)                            # EUP rsqrt
        out = (y - mean) * inv_std * gamma_ref[...] + beta_ref[...]
        o_ref[...] = out.astype(o_ref.dtype)


# ----------------------------------------------------------------------------
# Wrapper: padding, dense bf16 adjacency, folded weights, grid / BlockSpecs
# ----------------------------------------------------------------------------

def gnn_layer_forward(params, x, edge_index, *, tile_n=512, tile_src=1024,
                      eps=1e-5, xs_resident_budget_bytes=8 * 2 ** 20):
    n, fin = x.shape
    fout = params["wl"].shape[1]

    fin_pad = _round_up(fin, 128)      # lane-dense MXU operands
    fout_pad = _round_up(fout, 128)    # lane-dense output stores

    # --- tile sizes: clamp to problem size; force mutual divisibility so n_pad is
    #     valid for BOTH tile sizes (fixes the lcm/padding correctness concern) ---
    n_128 = _round_up(n, 128)
    tile_n = max(128, min((tile_n // 128) * 128, n_128))
    tile_src = max(128, min((tile_src // 128) * 128, n_128))
    if tile_src >= tile_n:
        tile_src = (tile_src // tile_n) * tile_n
    else:
        tile_n = (tile_n // tile_src) * tile_src
    n_pad = _round_up(n, max(tile_n, tile_src))
    assert n_pad % tile_n == 0 and n_pad % tile_src == 0

    # --- dense adjacency adj[dst, src] in {0,1}, built DIRECTLY in bf16 ---
    src, dst = edge_index[0], edge_index[1]
    adj = jnp.zeros((n_pad, n_pad), jnp.bfloat16).at[dst, src].set(1.0)

    # degree / reciprocal computed once here, not per accumulation step
    deg = jnp.sum(adj, axis=1, keepdims=True, dtype=jnp.float32)       # exact: 0/1 values
    inv_deg = 1.0 / jnp.maximum(deg, 1.0)                              # (n_pad, 1) f32

    x_p = jnp.zeros((n_pad, fin_pad), jnp.bfloat16).at[:n, :fin].set(
        x.astype(jnp.bfloat16))

    # --- fold residual projection into the root weight; fuse [W_l ; W_r + W_p] ---
    wl, bl, wr = params["wl"], params["bl"], params["wr"]
    if params.get("wp") is not None:
        wrp = wr + params["wp"]
        b_sum = bl + params["bp"]
    else:
        # in_channels == out_channels: identity residual folded as W_r + I
        wrp = wr + jnp.eye(fin, fout, dtype=wr.dtype)
        b_sum = bl
    w_cat = jnp.zeros((2 * fin_pad, fout_pad), jnp.bfloat16)
    w_cat = w_cat.at[:fin, :fout].set(wl.astype(jnp.bfloat16))
    w_cat = w_cat.at[fin_pad:fin_pad + fin, :fout].set(wrp.astype(jnp.bfloat16))

    def pad_v(v):
        return (jnp.zeros((1, fout_pad), jnp.float32)
                .at[0, :v.shape[-1]].set(v.astype(jnp.float32)))

    b_cat = pad_v(b_sum)
    gamma, beta = pad_v(params["gamma"]), pad_v(params["beta"])

    # --- source features fully VMEM-resident when small (kills re-streaming) ---
    xs_resident = n_pad * fin_pad * 2 <= xs_resident_budget_bytes
    if xs_resident:
        xs_spec = pl.BlockSpec((n_pad, fin_pad), lambda i, k: (0, 0))
    else:
        xs_spec = pl.BlockSpec((tile_src, fin_pad), lambda i, k: (k, 0))

    grid = (n_pad // tile_n, n_pad // tile_src)

    def full(shape):
        return pl.BlockSpec(shape, lambda i, k: (0, 0))

    # --- explicit VMEM budget (double-buffered inputs + scratch) with headroom ---
    est = (2 * tile_n * tile_src * 2                                   # adj tiles (bf16)
           + (n_pad * fin_pad * 2 if xs_resident else 2 * tile_src * fin_pad * 2)
           + 2 * tile_n * fin_pad * 2                                  # x (dest rows)
           + 2 * tile_n * 128 * 4                                      # 1/deg (lane-padded)
           + 2 * (2 * fin_pad) * fout_pad * 2                          # fused weight
           + 2 * 3 * 8 * fout_pad * 4                                  # bias/gamma/beta
           + 2 * tile_n * fout_pad * 4                                 # output tiles
           + tile_n * fin_pad * 4)                                     # acc scratch
    vmem_limit = int(min(max(2 * est, 32 * 2 ** 20), 100 * 2 ** 20))

    out = pl.pallas_call(
        functools.partial(_gnn_layer_kernel, out_valid=fout, tile_src=tile_src,
                          xs_resident=xs_resident, eps=eps),
        out_shape=jax.ShapeDtypeStruct((n_pad, fout_pad), jnp.float32),
        grid_spec=pltpu.PrefetchScalarGridSpec(
            num_scalar_prefetch=0,
            grid=grid,
            in_specs=[
                pl.BlockSpec((tile_n, tile_src), lambda i, k: (i, k)),  # adj tile
                xs_spec,                                                # x (source rows)
                pl.BlockSpec((tile_n, fin_pad), lambda i, k: (i, 0)),   # x (dest rows)
                pl.BlockSpec((tile_n, 1), lambda i, k: (i, 0)),         # 1/deg per row
                full((2 * fin_pad, fout_pad)),                          # [W_l ; W_r+W_p]
                full((1, fout_pad)),                                    # b_l + b_p
                full((1, fout_pad)),                                    # layernorm gamma
                full((1, fout_pad)),                                    # layernorm beta
            ],
            out_specs=pl.BlockSpec((tile_n, fout_pad), lambda i, k: (i, 0)),
            scratch_shapes=[
                pltpu.VMEM((tile_n, fin_pad), jnp.float32),             # neighbor-sum acc
            ],
        ),
        compiler_params=pltpu.CompilerParams(
            dimension_semantics=("parallel", "arbitrary"),
            vmem_limit_bytes=vmem_limit,
        ),
    )(adj, x_p, x_p, inv_deg, w_cat, b_cat, gamma, beta)

    return out[:n, :fout]


# ----------------------------------------------------------------------------
# Parameter init (deterministic; shapes follow the PyTorch module __init__)
# ----------------------------------------------------------------------------

def init_gnn_layer(key, in_channels, out_channels):
    k1, k2, k3, k4, k5 = jax.random.split(key, 5)

    def glorot(k, shape):
        lim = math.sqrt(6.0 / (shape[0] + shape[1]))
        return jax.random.uniform(k, shape, jnp.float32, -lim, lim)

    blim = 1.0 / math.sqrt(in_channels)
    params = {
        "wl": glorot(k1, (in_channels, out_channels)),          # SAGE lin_l (neighbors, bias)
        "bl": jax.random.uniform(k4, (out_channels,), jnp.float32, -blim, blim),
        "wr": glorot(k2, (in_channels, out_channels)),          # SAGE lin_r (root, no bias)
        "gamma": jnp.ones((out_channels,), jnp.float32),        # LayerNorm affine
        "beta": jnp.zeros((out_channels,), jnp.float32),
        "wp": None, "bp": None,
    }
    if in_channels != out_channels:                             # residual projection
        params["wp"] = glorot(k3, (in_channels, out_channels))
        params["bp"] = jax.random.uniform(k5, (out_channels,), jnp.float32, -blim, blim)
    return params


# ----------------------------------------------------------------------------
# Pure-JAX reference (mirrors the kernel's bf16 operand rounding)
# ----------------------------------------------------------------------------

def gnn_layer_reference(params, x, edge_index, eps=1e-5):
    hp = jax.lax.Precision.HIGHEST
    n, fin = x.shape
    src, dst = edge_index[0], edge_index[1]
    adj = jnp.zeros((n, n), jnp.float32).at[dst, src].set(1.0)

    def b16(a):
        return a.astype(jnp.bfloat16).astype(jnp.float32)

    xb = b16(x)
    deg = jnp.sum(adj, axis=-1, keepdims=True)
    agg = jnp.dot(adj, xb, precision=hp) / jnp.maximum(deg, 1.0)
    agg = b16(agg)

    h = jnp.dot(agg, b16(params["wl"]), precision=hp) + params["bl"]
    h = h + jnp.dot(xb, b16(params["wr"]), precision=hp)
    if params.get("wp") is not None:
        ident = jnp.dot(xb, b16(params["wp"]), precision=hp) + params["bp"]
    else:
        ident = xb
    y = jnp.maximum(h + ident, 0.0)
    mean = jnp.mean(y, axis=-1, keepdims=True)
    var = jnp.mean((y - mean) ** 2, axis=-1, keepdims=True)
    return (y - mean) / jnp.sqrt(var + eps) * params["gamma"] + params["beta"]


# ----------------------------------------------------------------------------
# Demo
# ----------------------------------------------------------------------------

if __name__ == "__main__":
    key = jax.random.PRNGKey(0)
    kx, ke1, ke2, kp = jax.random.split(key, 4)

    num_nodes = 200
    in_channels = 64
    out_channels = 128      # != in_channels -> residual projection path is exercised
    num_edges = 800

    x = jax.random.normal(kx, (num_nodes, in_channels), jnp.float32)
    src = jax.random.randint(ke1, (num_edges,), 0, num_nodes)
    dst = jax.random.randint(ke2, (num_edges,), 0, num_nodes)
    edge_index = jnp.stack([src, dst])

    params = init_gnn_layer(kp, in_channels, out_channels)

    out = gnn_layer_forward(params, x, edge_index)
    out = jax.block_until_ready(out)

    ref = gnn_layer_reference(params, x, edge_index)

    assert out.shape == (num_nodes, out_channels)
    assert bool(jnp.all(jnp.isfinite(out)))
    max_err = float(jnp.max(jnp.abs(out - ref)))
    assert max_err < 5e-2, f"max abs error vs reference: {max_err}"
    print("KERNEL_OK")
</pallas_src>

<mosaic_0001>
module attributes {stable_mosaic.version = 11 : i64} {
  func.func @_gnn_layer_kernel(%arg0: i32, %arg1: i32, %arg2: memref<256x256xbf16, #tpu.memory_space<vmem>>, %arg3: memref<256x128xbf16, #tpu.memory_space<vmem>>, %arg4: memref<256x128xbf16, #tpu.memory_space<vmem>>, %arg5: memref<256x1xf32, #tpu.memory_space<vmem>>, %arg6: memref<256x128xbf16, #tpu.memory_space<vmem>>, %arg7: memref<1x128xf32, #tpu.memory_space<vmem>>, %arg8: memref<1x128xf32, #tpu.memory_space<vmem>>, %arg9: memref<1x128xf32, #tpu.memory_space<vmem>>, %arg10: memref<256x128xf32, #tpu.memory_space<vmem>>, %arg11: memref<256x128xf32, #tpu.memory_space<vmem>>) attributes {dimension_semantics = [#tpu.dimension_semantics<parallel>, #tpu.dimension_semantics<arbitrary>], iteration_bounds = array<i64: 1, 1>, scalar_prefetch = 0 : i64, scratch_operands = 1 : i64, tpu.core_type = #tpu.core_type<tc>, window_params = [{transform_indices = @transform_0, window_bounds = array<i64: 256, 256>}, {pipeline_mode = #tpu.pipeline_mode<synchronous>, transform_indices = @transform_1, window_bounds = array<i64: 256, 128>}, {transform_indices = @transform_2, window_bounds = array<i64: 256, 128>}, {transform_indices = @transform_3, window_bounds = array<i64: 256, 1>}, {pipeline_mode = #tpu.pipeline_mode<synchronous>, transform_indices = @transform_4, window_bounds = array<i64: 256, 128>}, {pipeline_mode = #tpu.pipeline_mode<synchronous>, transform_indices = @transform_5, window_bounds = array<i64: 1, 128>}, {pipeline_mode = #tpu.pipeline_mode<synchronous>, transform_indices = @transform_6, window_bounds = array<i64: 1, 128>}, {pipeline_mode = #tpu.pipeline_mode<synchronous>, transform_indices = @transform_7, window_bounds = array<i64: 1, 128>}, {transform_indices = @transform_8, window_bounds = array<i64: 256, 128>}]} {
    %c0_i32 = arith.constant 0 : i32
    %0 = arith.cmpi eq, %arg1, %c0_i32 : i32
    %1 = arith.extui %0 : i1 to i32
    %c0_i32_0 = arith.constant 0 : i32
    %2 = arith.cmpi ne, %1, %c0_i32_0 : i32
    scf.if %2 {
      %cst_9 = arith.constant 0.000000e+00 : f32
      %15 = vector.broadcast %cst_9 : f32 to vector<256x128xf32>
      %c0_10 = arith.constant 0 : index
      %c0_11 = arith.constant 0 : index
      %16 = vector.load %arg11[%c0_10, %c0_11] : memref<256x128xf32, #tpu.memory_space<vmem>>, vector<256x128xf32>
      tpu.vector_store %arg11[%c0_10, %c0_11], %15 {strides = array<i32>} : memref<256x128xf32, #tpu.memory_space<vmem>>, vector<256x128xf32>,
    } else {
    }
    %c256_i32 = arith.constant 256 : i32
    %3 = arith.muli %arg1, %c256_i32 : i32
    %4 = tpu.assume_multiple %3, 256 : i32
    %5 = arith.index_cast %4 : i32 to index
    %c0 = arith.constant 0 : index
    %6 = vector.load %arg3[%5, %c0] : memref<256x128xbf16, #tpu.memory_space<vmem>>, vector<256x128xbf16>
    %c0_1 = arith.constant 0 : index
    %c0_2 = arith.constant 0 : index
    %7 = vector.load %arg11[%c0_1, %c0_2] : memref<256x128xf32, #tpu.memory_space<vmem>>, vector<256x128xf32>
    %c0_3 = arith.constant 0 : index
    %c0_4 = arith.constant 0 : index
    %8 = vector.load %arg2[%c0_3, %c0_4] : memref<256x256xbf16, #tpu.memory_space<vmem>>, vector<256x256xbf16>
    %cst = arith.constant dense<0.000000e+00> : vector<256x128xf32>
    %9 = tpu.matmul %8, %6, %cst {dimension_numbers = #tpu.dot_dimension_numbers<[1], [0], [0], [1], [0, 0, 1, 1], [], []>} : vector<256x256xbf16>, vector<256x128xbf16>, vector<256x128xf32> -> vector<256x128xf32>
    %10 = arith.addf %7, %9 : vector<256x128xf32>
    %c0_5 = arith.constant 0 : index
    %c0_6 = arith.constant 0 : index
    %11 = vector.load %arg11[%c0_5, %c0_6] : memref<256x128xf32, #tpu.memory_space<vmem>>, vector<256x128xf32>
    tpu.vector_store %arg11[%c0_5, %c0_6], %10 {strides = array<i32>} : memref<256x128xf32, #tpu.memory_space<vmem>>, vector<256x128xf32>,
    %c0_i32_7 = arith.constant 0 : i32
    %12 = arith.cmpi eq, %arg1, %c0_i32_7 : i32
    %13 = arith.extui %12 : i1 to i32
    %c0_i32_8 = arith.constant 0 : i32
    %14 = arith.cmpi ne, %13, %c0_i32_8 : i32
    scf.if %14 {
      %c0_9 = arith.constant 0 : index
      %c0_10 = arith.constant 0 : index
      %15 = vector.load %arg11[%c0_9, %c0_10] : memref<256x128xf32, #tpu.memory_space<vmem>>, vector<256x128xf32>
      %c0_11 = arith.constant 0 : index
      %c0_12 = arith.constant 0 : index
      %16 = vector.load %arg5[%c0_11, %c0_12] : memref<256x1xf32, #tpu.memory_space<vmem>>, vector<256x1xf32>
      %17 = vector.broadcast %16 : vector<256x1xf32> to vector<256x128xf32>
      %18 = arith.mulf %15, %17 : vector<256x128xf32>
      %19 = arith.truncf %18 : vector<256x128xf32> to vector<256x128xbf16>
      %c0_13 = arith.constant 0 : index
      %c0_14 = arith.constant 0 : index
      %20 = vector.load %arg4[%c0_13, %c0_14] : memref<256x128xbf16, #tpu.memory_space<vmem>>, vector<256x128xbf16>
      %21 = tpu.concatenate %19, %20 in 1 : vector<256x128xbf16>, vector<256x128xbf16> -> vector<256x256xbf16>
      %c0_15 = arith.constant 0 : index
      %c0_16 = arith.constant 0 : index
      %22 = vector.load %arg6[%c0_15, %c0_16] : memref<256x128xbf16, #tpu.memory_space<vmem>>, vector<256x128xbf16>
      %cst_17 = arith.constant dense<0.000000e+00> : vector<256x128xf32>
      %23 = tpu.matmul %21, %22, %cst_17 {dimension_numbers = #tpu.dot_dimension_numbers<[1], [0], [0], [1], [0, 0, 1, 1], [], []>} : vector<256x256xbf16>, vector<256x128xbf16>, vector<256x128xf32> -> vector<256x128xf32>
      %c0_18 = arith.constant 0 : index
      %c0_19 = arith.constant 0 : index
      %24 = vector.load %arg7[%c0_18, %c0_19] : memref<1x128xf32, #tpu.memory_space<vmem>>, vector<1x128xf32>
      %25 = vector.broadcast %24 : vector<1x128xf32> to vector<256x128xf32>
      %26 = arith.addf %23, %25 : vector<256x128xf32>
      %cst_20 = arith.constant 0.000000e+00 : f32
      %27 = vector.broadcast %cst_20 : f32 to vector<256x128xf32>
      %28 = arith.maximumf %26, %27 : vector<256x128xf32>
      %cst_21 = arith.constant dense<0.000000e+00> : vector<256xf32>
      %29 = vector.multi_reduction <add>, %28, %cst_21 [1] : vector<256x128xf32> to vector<256xf32>
      %30 = vector.shape_cast %29 : vector<256xf32> to vector<256x1xf32>
      %cst_22 = arith.constant 7.812500e-03 : f32
      %31 = vector.broadcast %cst_22 : f32 to vector<256x1xf32>
      %32 = arith.mulf %30, %31 : vector<256x1xf32>
      %33 = vector.broadcast %32 : vector<256x1xf32> to vector<256x128xf32>
      %34 = arith.subf %28, %33 : vector<256x128xf32>
      %35 = arith.mulf %34, %34 : vector<256x128xf32>
      %cst_23 = arith.constant dense<0.000000e+00> : vector<256xf32>
      %36 = vector.multi_reduction <add>, %35, %cst_23 [1] : vector<256x128xf32> to vector<256xf32>
      %37 = vector.shape_cast %36 : vector<256xf32> to vector<256x1xf32>
      %cst_24 = arith.constant 7.812500e-03 : f32
      %38 = vector.broadcast %cst_24 : f32 to vector<256x1xf32>
      %39 = arith.mulf %37, %38 : vector<256x1xf32>
      %cst_25 = arith.constant 9.99999974E-6 : f32
      %40 = vector.broadcast %cst_25 : f32 to vector<256x1xf32>
      %41 = arith.addf %39, %40 : vector<256x1xf32>
      %42 = math.rsqrt %41 : vector<256x1xf32>
      %43 = vector.broadcast %32 : vector<256x1xf32> to vector<256x128xf32>
      %44 = arith.subf %28, %43 : vector<256x128xf32>
      %45 = vector.broadcast %42 : vector<256x1xf32> to vector<256x128xf32>
      %46 = arith.mulf %44, %45 : vector<256x128xf32>
      %c0_26 = arith.constant 0 : index
      %c0_27 = arith.constant 0 : index
      %47 = vector.load %arg8[%c0_26, %c0_27] : memref<1x128xf32, #tpu.memory_space<vmem>>, vector<1x128xf32>
      %48 = vector.broadcast %47 : vector<1x128xf32> to vector<256x128xf32>
      %49 = arith.mulf %46, %48 : vector<256x128xf32>
      %c0_28 = arith.constant 0 : index
      %c0_29 = arith.constant 0 : index
      %50 = vector.load %arg9[%c0_28, %c0_29] : memref<1x128xf32, #tpu.memory_space<vmem>>, vector<1x128xf32>
      %51 = vector.broadcast %50 : vector<1x128xf32> to vector<256x128xf32>
      %52 = arith.addf %49, %51 : vector<256x128xf32>
      %c0_30 = arith.constant 0 : index
      %c0_31 = arith.constant 0 : index
      %53 = vector.load %arg10[%c0_30, %c0_31] : memref<256x128xf32, #tpu.memory_space<vmem>>, vector<256x128xf32>
      tpu.vector_store %arg10[%c0_30, %c0_31], %52 {strides = array<i32>} : memref<256x128xf32, #tpu.memory_space<vmem>>, vector<256x128xf32>,
    } else {
    }
    return
  }
  func.func @transform_0(%arg0: i32, %arg1: i32) -> (i32, i32) {
    %c0_i32 = arith.constant 0 : i32
    return %arg0, %arg1 : i32, i32
  }
  func.func @transform_1(%arg0: i32, %arg1: i32) -> (i32, i32) {
    %c0_i32 = arith.constant 0 : i32
    %c0_i32_0 = arith.constant 0 : i32
    %c0_i32_1 = arith.constant 0 : i32
    return %c0_i32, %c0_i32_0 : i32, i32
  }
  func.func @transform_2(%arg0: i32, %arg1: i32) -> (i32, i32) {
    %c0_i32 = arith.constant 0 : i32
    %c0_i32_0 = arith.constant 0 : i32
    return %arg0, %c0_i32 : i32, i32
  }
  func.func @transform_3(%arg0: i32, %arg1: i32) -> (i32, i32) {
    %c0_i32 = arith.constant 0 : i32
    %c0_i32_0 = arith.constant 0 : i32
    return %arg0, %c0_i32 : i32, i32
  }
  func.func @transform_4(%arg0: i32, %arg1: i32) -> (i32, i32) {
    %c0_i32 = arith.constant 0 : i32
    %c0_i32_0 = arith.constant 0 : i32
    %c0_i32_1 = arith.constant 0 : i32
    return %c0_i32, %c0_i32_0 : i32, i32
  }
  func.func @transform_5(%arg0: i32, %arg1: i32) -> (i32, i32) {
    %c0_i32 = arith.constant 0 : i32
    %c0_i32_0 = arith.constant 0 : i32
    %c0_i32_1 = arith.constant 0 : i32
    return %c0_i32, %c0_i32_0 : i32, i32
  }
  func.func @transform_6(%arg0: i32, %arg1: i32) -> (i32, i32) {
    %c0_i32 = arith.constant 0 : i32
    %c0_i32_0 = arith.constant 0 : i32
    %c0_i32_1 = arith.constant 0 : i32
    return %c0_i32, %c0_i32_0 : i32, i32
  }
  func.func @transform_7(%arg0: i32, %arg1: i32) -> (i32, i32) {
    %c0_i32 = arith.constant 0 : i32
    %c0_i32_0 = arith.constant 0 : i32
    %c0_i32_1 = arith.constant 0 : i32
    return %c0_i32, %c0_i32_0 : i32, i32
  }
  func.func @transform_8(%arg0: i32, %arg1: i32) -> (i32, i32) {
    %c0_i32 = arith.constant 0 : i32
    %c0_i32_0 = arith.constant 0 : i32
    return %arg0, %c0_i32 : i32, i32
  }
}

</mosaic_0001>

<llo_original>
// kernel: tpu_custom_call.1
$region0: #{tpu_custom_call.1}
  #allocation0 [shape = 'u32[]', space=smem, size = 0x4, offset = 0x4, fixed_abs, tag = 'smem constant byte address 0x4 - core index']
  #allocation1 [shape = 'u32[144,128]{1,0:T(1,128)}', space=vmem, size = 0x12000, scoped, tag = 'internal scratch']
  #allocation2 [shape = 'f32[256,128]{1,0:T(8,128)}', space=vmem, size = 0x20000, scoped, tag = 'scratch operand']
  %s0 = inlined_call_operand.vmem [shape: bf16[256,256], index: 0, kind: input, shape index: {}]
  %s1 = inlined_call_operand.hbm [shape: bf16[256,128], index: 1, kind: input, shape index: {}]
  %s2 = inlined_call_operand.hbm [shape: bf16[256,128], index: 2, kind: input, shape index: {}]
  %s3 = inlined_call_operand.vmem [shape: f32[256,1], index: 3, kind: input, shape index: {}]
  %s4 = inlined_call_operand.hbm [shape: bf16[256,128], index: 4, kind: input, shape index: {}]
  %s5 = inlined_call_operand.vmem [shape: f32[1,128], index: 5, kind: input, shape index: {}]
  %s6 = inlined_call_operand.vmem [shape: f32[1,128], index: 6, kind: input, shape index: {}]
  %s7 = inlined_call_operand.vmem [shape: f32[1,128], index: 7, kind: input, shape index: {}]
  %s8 = inlined_call_operand.hbm [shape: f32[256,128], index: 8, kind: output, shape index: {}]
  %s9 = sld [smem:[#allocation0]]
  $region62: #{tpu_custom_call.1} parent=0
    _
  %s11 = ssub.s32 1, %s9
  %s12 = scalar_select 0, %s11, %s9
  $region1: #{tpu_custom_call.1} parent=0
    #allocation3 [shape = 'u8[65536]{0}', space=vmem, size = 0x10000, scoped, tag = 'input window, operand 1, single buffered']
    #allocation4 [shape = 's32[1]{0}', space=sflag, size = 0x4, scoped, tag = 'scoped memory for tpu_custom_call.1']
    #allocation5 [shape = 's32[1]{0}', space=sflag, size = 0x4, scoped, tag = 'scoped memory for tpu_custom_call.1']
    #allocation6 [shape = 'u8[65536]{0}', space=vmem, size = 0x10000, scoped, tag = 'input window, operand 2, single buffered']
    #allocation7 [shape = 's32[1]{0}', space=sflag, size = 0x4, scoped, tag = 'scoped memory for tpu_custom_call.1']
    #allocation8 [shape = 'u8[65536]{0}', space=vmem, size = 0x10000, scoped, tag = 'input window, operand 4, single buffered']
    #allocation9 [shape = 'u8[131072]{0}', space=vmem, size = 0x20000, scoped, tag = 'output window, operand 0, single buffered']
    %13 = vsyncpa [#allocation4], 0
    %14 = vsyncpa [#allocation7], 0
    %15 = vsyncpa [#allocation5], 0
    // Predicated region
    $region2: #{tpu_custom_call.1} parent=1 // pred_check
      _
    $region3: #{tpu_custom_call.1} parent=1 // pred_check_branch
      %17 = sbr.rel (0) target = $region5
    $region4: #{tpu_custom_call.1} parent=1 // pred_region
      _
    $region5: #{tpu_custom_call.1} parent=1 // pred_fallthru
      _
    // Predicated region
    $region6: #{tpu_custom_call.1} parent=1 // pred_check
      _
    $region7: #{tpu_custom_call.1} parent=1 // pred_check_branch
      %19 = sbr.rel (0) target = $region9
    $region8: #{tpu_custom_call.1} parent=1 // pred_region
      %s21 = ssub.s32 2048, 2048
      %22 = vsyncadd [#allocation4], %s21
      %s23 = sshll.u32 [#allocation3], 4
      %s24 = int_to_ptr.vmem [resolvable:$true] %s23
      %29 = dma.hbm_to_vmem [thread:$0]  %s1, 2048, %s24, [#allocation4], 64, 64, 4
    $region9: #{tpu_custom_call.1} parent=1 // pred_fallthru
      _
    // Predicated region
    $region10: #{tpu_custom_call.1} parent=1 // pred_check
      _
    $region11: #{tpu_custom_call.1} parent=1 // pred_check_branch
      %31 = sbr.rel (0) target = $region13
    $region12: #{tpu_custom_call.1} parent=1 // pred_region
      %s33 = ssub.s32 2048, 2048
      %34 = vsyncadd [#allocation7], %s33
      %s35 = sshll.u32 [#allocation6], 4
      %s36 = int_to_ptr.vmem [resolvable:$true] %s35
      %41 = dma.hbm_to_vmem [thread:$0]  %s2, 2048, %s36, [#allocation7], 64, 64, 4
    $region13: #{tpu_custom_call.1} parent=1 // pred_fallthru
      _
    // Predicated region
    $region14: #{tpu_custom_call.1} parent=1 // pred_check
      _
    $region15: #{tpu_custom_call.1} parent=1 // pred_check_branch
      %43 = sbr.rel (0) target = $region17
    $region16: #{tpu_custom_call.1} parent=1 // pred_region
      _
    $region17: #{tpu_custom_call.1} parent=1 // pred_fallthru
      _
    // Predicated region
    $region18: #{tpu_custom_call.1} parent=1 // pred_check
      _
    $region19: #{tpu_custom_call.1} parent=1 // pred_check_branch
      %45 = sbr.rel (0) target = $region21
    $region20: #{tpu_custom_call.1} parent=1 // pred_region
      %s47 = ssub.s32 2048, 2048
      %48 = vsyncadd [#allocation7], %s47
      %s49 = sshll.u32 [#allocation8], 4
      %s50 = int_to_ptr.vmem [resolvable:$true] %s49
      %55 = dma.hbm_to_vmem [thread:$0]  %s4, 2048, %s50, [#allocation7], 64, 64, 4
    $region21: #{tpu_custom_call.1} parent=1 // pred_fallthru
      _
    // Predicated region
    $region22: #{tpu_custom_call.1} parent=1 // pred_check
      _
    $region23: #{tpu_custom_call.1} parent=1 // pred_check_branch
      %57 = sbr.rel (0) target = $region25
    $region24: #{tpu_custom_call.1} parent=1 // pred_region
      _
    $region25: #{tpu_custom_call.1} parent=1 // pred_fallthru
      _
    // Predicated region
    $region26: #{tpu_custom_call.1} parent=1 // pred_check
      _
    $region27: #{tpu_custom_call.1} parent=1 // pred_check_branch
      %59 = sbr.rel (0) target = $region29
    $region28: #{tpu_custom_call.1} parent=1 // pred_region
      _
    $region29: #{tpu_custom_call.1} parent=1 // pred_fallthru
      _
    // Predicated region
    $region30: #{tpu_custom_call.1} parent=1 // pred_check
      _
    $region31: #{tpu_custom_call.1} parent=1 // pred_check_branch
      %61 = sbr.rel (0) target = $region33
    $region32: #{tpu_custom_call.1} parent=1 // pred_region
      _
    $region33: #{tpu_custom_call.1} parent=1 // pred_fallthru
      _
    // Predicated region
    $region34: #{tpu_custom_call.1} parent=1 // pred_check
      _
    $region35: #{tpu_custom_call.1} parent=1 // pred_check_branch
      %63 = sbr.rel (0) target = $region37
    $region36: #{tpu_custom_call.1} parent=1 // pred_region
      %64 = dma.done [#allocation4], 2048
    $region37: #{tpu_custom_call.1} parent=1 // pred_fallthru
      _
    // Predicated region
    $region38: #{tpu_custom_call.1} parent=1 // pred_check
      _
    $region39: #{tpu_custom_call.1} parent=1 // pred_check_branch
      %66 = sbr.rel (0) target = $region41
    $region40: #{tpu_custom_call.1} parent=1 // pred_region
      %67 = dma.done [#allocation7], 2048
    $region41: #{tpu_custom_call.1} parent=1 // pred_fallthru
      _
    // Predicated region
    $region42: #{tpu_custom_call.1} parent=1 // pred_check
      _
    $region43: #{tpu_custom_call.1} parent=1 // pred_check_branch
      %69 = sbr.rel (0) target = $region45
    $region44: #{tpu_custom_call.1} parent=1 // pred_region
      %70 = dma.done [#allocation7], 2048
    $region45: #{tpu_custom_call.1} parent=1 // pred_fallthru
      _
    %p72 = scmp.eq.s32.totalorder 0, 0
    // Predicated region
    $region46: #{tpu_custom_call.1} parent=1 // pred_check
      %p73 = pneg %p72
    $region47: #{tpu_custom_call.1} parent=1 // pred_check_branch
      %75 = sbr.rel (%p73) target = $region49
    $region48: #{tpu_custom_call.1} parent=1 // pred_region
      %76 = vst [vmem:[#allocation2] sm:$0xff] 0.0
      %77 = vst [vmem:[#allocation2 + $0x8] sm:$0xff] 0.0
      %78 = vst [vmem:[#allocation2 + $0x10] sm:$0xff] 0.0
      %79 = vst [vmem:[#allocation2 + $0x18] sm:$0xff] 0.0
      %80 = vst [vmem:[#allocation2 + $0x20] sm:$0xff] 0.0
      %81 = vst [vmem:[#allocation2 + $0x28] sm:$0xff] 0.0
      %82 = vst [vmem:[#allocation2 + $0x30] sm:$0xff] 0.0
      %83 = vst [vmem:[#allocation2 + $0x38] sm:$0xff] 0.0
      %84 = vst [vmem:[#allocation2 + $0x40] sm:$0xff] 0.0
      %85 = vst [vmem:[#allocation2 + $0x48] sm:$0xff] 0.0
      %86 = vst [vmem:[#allocation2 + $0x50] sm:$0xff] 0.0
      %87 = vst [vmem:[#allocation2 + $0x58] sm:$0xff] 0.0
      %88 = vst [vmem:[#allocation2 + $0x60] sm:$0xff] 0.0
      %89 = vst [vmem:[#allocation2 + $0x68] sm:$0xff] 0.0
      %90 = vst [vmem:[#allocation2 + $0x70] sm:$0xff] 0.0
      %91 = vst [vmem:[#allocation2 + $0x78] sm:$0xff] 0.0
      %92 = vst [vmem:[#allocation2 + $0x80] sm:$0xff] 0.0
      %93 = vst [vmem:[#allocation2 + $0x88] sm:$0xff] 0.0
      %94 = vst [vmem:[#allocation2 + $0x90] sm:$0xff] 0.0
      %95 = vst [vmem:[#allocation2 + $0x98] sm:$0xff] 0.0
      %96 = vst [vmem:[#allocation2 + $0xa0] sm:$0xff] 0.0
      %97 = vst [vmem:[#allocation2 + $0xa8] sm:$0xff] 0.0
      %98 = vst [vmem:[#allocation2 + $0xb0] sm:$0xff] 0.0
      %99 = vst [vmem:[#allocation2 + $0xb8] sm:$0xff] 0.0
      %100 = vst [vmem:[#allocation2 + $0xc0] sm:$0xff] 0.0
      %101 = vst [vmem:[#allocation2 + $0xc8] sm:$0xff] 0.0
      %102 = vst [vmem:[#allocation2 + $0xd0] sm:$0xff] 0.0
      %103 = vst [vmem:[#allocation2 + $0xd8] sm:$0xff] 0.0
      %104 = vst [vmem:[#allocation2 + $0xe0] sm:$0xff] 0.0
      %105 = vst [vmem:[#allocation2 + $0xe8] sm:$0xff] 0.0
      %106 = vst [vmem:[#allocation2 + $0xf0] sm:$0xff] 0.0
      %107 = vst [vmem:[#allocation2 + $0xf8] sm:$0xff] 0.0
    $region49: #{tpu_custom_call.1} parent=1 // pred_fallthru
      _
    %s108 = smul.u32 0, 256
    %s109 = sshra.s32 %s108, 3
    %s110 = sand.u32 %s108, 7
    %s111 = smul.addr %s109, 4
    %s112 = scalar_lea.vmem [#allocation3], %s111
    %v113 = vld [vmem:[%s112] sm:$0xf]
    %v114 = vld [vmem:[%s112 + $0x4] sm:$0xf]
    %v115 = vld [vmem:[%s112 + $0x8] sm:$0xf]
    %v116 = vld [vmem:[%s112 + $0xc] sm:$0xf]
    %v117 = vld [vmem:[%s112 + $0x10] sm:$0xf]
    %v118 = vld [vmem:[%s112 + $0x14] sm:$0xf]
    %v119 = vld [vmem:[%s112 + $0x18] sm:$0xf]
    %v120 = vld [vmem:[%s112 + $0x1c] sm:$0xf]
    %v121 = vld [vmem:[%s112 + $0x20] sm:$0xf]
    %v122 = vld [vmem:[%s112 + $0x24] sm:$0xf]
    %v123 = vld [vmem:[%s112 + $0x28] sm:$0xf]
    %v124 = vld [vmem:[%s112 + $0x2c] sm:$0xf]
    %v125 = vld [vmem:[%s112 + $0x30] sm:$0xf]
    %v126 = vld [vmem:[%s112 + $0x34] sm:$0xf]
    %v127 = vld [vmem:[%s112 + $0x38] sm:$0xf]
    %v128 = vld [vmem:[%s112 + $0x3c] sm:$0xf]
    %v129 = vld [vmem:[%s112 + $0x40] sm:$0xf]
    %v130 = vld [vmem:[%s112 + $0x44] sm:$0xf]
    %v131 = vld [vmem:[%s112 + $0x48] sm:$0xf]
    %v132 = vld [vmem:[%s112 + $0x4c] sm:$0xf]
    %v133 = vld [vmem:[%s112 + $0x50] sm:$0xf]
    %v134 = vld [vmem:[%s112 + $0x54] sm:$0xf]
    %v135 = vld [vmem:[%s112 + $0x58] sm:$0xf]
    %v136 = vld [vmem:[%s112 + $0x5c] sm:$0xf]
    %v137 = vld [vmem:[%s112 + $0x60] sm:$0xf]
    %v138 = vld [vmem:[%s112 + $0x64] sm:$0xf]
    %v139 = vld [vmem:[%s112 + $0x68] sm:$0xf]
    %v140 = vld [vmem:[%s112 + $0x6c] sm:$0xf]
    %v141 = vld [vmem:[%s112 + $0x70] sm:$0xf]
    %v142 = vld [vmem:[%s112 + $0x74] sm:$0xf]
    %v143 = vld [vmem:[%s112 + $0x78] sm:$0xf]
    %v144 = vld [vmem:[%s112 + $0x7c] sm:$0xf]
    %v145 = vld [vmem:[#allocation2] sm:$0xff]
    %v146 = vld [vmem:[#allocation2 + $0x8] sm:$0xff]
    %v147 = vld [vmem:[#allocation2 + $0x10] sm:$0xff]
    %v148 = vld [vmem:[#allocation2 + $0x18] sm:$0xff]
    %v149 = vld [vmem:[#allocation2 + $0x20] sm:$0xff]
    %v150 = vld [vmem:[#allocation2 + $0x28] sm:$0xff]
    %v151 = vld [vmem:[#allocation2 + $0x30] sm:$0xff]
    %v152 = vld [vmem:[#allocation2 + $0x38] sm:$0xff]
    %v153 = vld [vmem:[#allocation2 + $0x40] sm:$0xff]
    %v154 = vld [vmem:[#allocation2 + $0x48] sm:$0xff]
    %v155 = vld [vmem:[#allocation2 + $0x50] sm:$0xff]
    %v156 = vld [vmem:[#allocation2 + $0x58] sm:$0xff]
    %v157 = vld [vmem:[#allocation2 + $0x60] sm:$0xff]
    %v158 = vld [vmem:[#allocation2 + $0x68] sm:$0xff]
    %v159 = vld [vmem:[#allocation2 + $0x70] sm:$0xff]
    %v160 = vld [vmem:[#allocation2 + $0x78] sm:$0xff]
    %v161 = vld [vmem:[#allocation2 + $0x80] sm:$0xff]
    %v162 = vld [vmem:[#allocation2 + $0x88] sm:$0xff]
    %v163 = vld [vmem:[#allocation2 + $0x90] sm:$0xff]
    %v164 = vld [vmem:[#allocation2 + $0x98] sm:$0xff]
    %v165 = vld [vmem:[#allocation2 + $0xa0] sm:$0xff]
    %v166 = vld [vmem:[#allocation2 + $0xa8] sm:$0xff]
    %v167 = vld [vmem:[#allocation2 + $0xb0] sm:$0xff]
    %v168 = vld [vmem:[#allocation2 + $0xb8] sm:$0xff]
    %v169 = vld [vmem:[#allocation2 + $0xc0] sm:$0xff]
    %v170 = vld [vmem:[#allocation2 + $0xc8] sm:$0xff]
    %v171 = vld [vmem:[#allocation2 + $0xd0] sm:$0xff]
    %v172 = vld [vmem:[#allocation2 + $0xd8] sm:$0xff]
    %v173 = vld [vmem:[#allocation2 + $0xe0] sm:$0xff]
    %v174 = vld [vmem:[#allocation2 + $0xe8] sm:$0xff]
    %v175 = vld [vmem:[#allocation2 + $0xf0] sm:$0xff]
    %v176 = vld [vmem:[#allocation2 + $0xf8] sm:$0xff]
    %v177 = vld [vmem:[%s0] sm:$0xff]
    %v178 = vld [vmem:[%s0 + $0x8] sm:$0xff]
    %v179 = vld [vmem:[%s0 + $0x10] sm:$0xff]
    %v180 = vld [vmem:[%s0 + $0x18] sm:$0xff]
    %v181 = vld [vmem:[%s0 + $0x20] sm:$0xff]
    %v182 = vld [vmem:[%s0 + $0x28] sm:$0xff]
    %v183 = vld [vmem:[%s0 + $0x30] sm:$0xff]
    %v184 = vld [vmem:[%s0 + $0x38] sm:$0xff]
    %v185 = vld [vmem:[%s0 + $0x40] sm:$0xff]
    %v186 = vld [vmem:[%s0 + $0x48] sm:$0xff]
    %v187 = vld [vmem:[%s0 + $0x50] sm:$0xff]
    %v188 = vld [vmem:[%s0 + $0x58] sm:$0xff]
    %v189 = vld [vmem:[%s0 + $0x60] sm:$0xff]
    %v190 = vld [vmem:[%s0 + $0x68] sm:$0xff]
    %v191 = vld [vmem:[%s0 + $0x70] sm:$0xff]
    %v192 = vld [vmem:[%s0 + $0x78] sm:$0xff]
    %v193 = vld [vmem:[%s0 + $0x80] sm:$0xff]
    %v194 = vld [vmem:[%s0 + $0x88] sm:$0xff]
    %v195 = vld [vmem:[%s0 + $0x90] sm:$0xff]
    %v196 = vld [vmem:[%s0 + $0x98] sm:$0xff]
    %v197 = vld [vmem:[%s0 + $0xa0] sm:$0xff]
    %v198 = vld [vmem:[%s0 + $0xa8] sm:$0xff]
    %v199 = vld [vmem:[%s0 + $0xb0] sm:$0xff]
    %v200 = vld [vmem:[%s0 + $0xb8] sm:$0xff]
    %v201 = vld [vmem:[%s0 + $0xc0] sm:$0xff]
    %v202 = vld [vmem:[%s0 + $0xc8] sm:$0xff]
    %v203 = vld [vmem:[%s0 + $0xd0] sm:$0xff]
    %v204 = vld [vmem:[%s0 + $0xd8] sm:$0xff]
    %v205 = vld [vmem:[%s0 + $0xe0] sm:$0xff]
    %v206 = vld [vmem:[%s0 + $0xe8] sm:$0xff]
    %v207 = vld [vmem:[%s0 + $0xf0] sm:$0xff]
    %v208 = vld [vmem:[%s0 + $0xf8] sm:$0xff]
    %v241 = vunpack.c.l.b16 %v177
    %v242 = vunpack.c.h.b16 %v177
    %v243 = vunpack.c.l.b16 %v178
    %v244 = vunpack.c.h.b16 %v178
    %v245 = vunpack.c.l.b16 %v179
    %v246 = vunpack.c.h.b16 %v179
    %v247 = vunpack.c.l.b16 %v180
    %v248 = vunpack.c.h.b16 %v180
    %v249 = vunpack.c.l.b16 %v181
    %v250 = vunpack.c.h.b16 %v181
    %v251 = vunpack.c.l.b16 %v182
    %v252 = vunpack.c.h.b16 %v182
    %v253 = vunpack.c.l.b16 %v183
    %v254 = vunpack.c.h.b16 %v183
    %v255 = vunpack.c.l.b16 %v184
    %v256 = vunpack.c.h.b16 %v184
    %v257 = vunpack.c.l.b16 %v185
    %v258 = vunpack.c.h.b16 %v185
    %v259 = vunpack.c.l.b16 %v186
    %v260 = vunpack.c.h.b16 %v186
    %v261 = vunpack.c.l.b16 %v187
    %v262 = vunpack.c.h.b16 %v187
    %v263 = vunpack.c.l.b16 %v188
    %v264 = vunpack.c.h.b16 %v188
    %v265 = vunpack.c.l.b16 %v189
    %v266 = vunpack.c.h.b16 %v189
    %v267 = vunpack.c.l.b16 %v190
    %v268 = vunpack.c.h.b16 %v190
    %v269 = vunpack.c.l.b16 %v191
    %v270 = vunpack.c.h.b16 %v191
    %v271 = vunpack.c.l.b16 %v192
    %v272 = vunpack.c.h.b16 %v192
    %v273 = vunpack.c.l.b16 %v193
    %v274 = vunpack.c.h.b16 %v193
    %v275 = vunpack.c.l.b16 %v194
    %v276 = vunpack.c.h.b16 %v194
    %v277 = vunpack.c.l.b16 %v195
    %v278 = vunpack.c.h.b16 %v195
    %v279 = vunpack.c.l.b16 %v196
    %v280 = vunpack.c.h.b16 %v196
    %v281 = vunpack.c.l.b16 %v197
    %v282 = vunpack.c.h.b16 %v197
    %v283 = vunpack.c.l.b16 %v198
    %v284 = vunpack.c.h.b16 %v198
    %v285 = vunpack.c.l.b16 %v199
    %v286 = vunpack.c.h.b16 %v199
    %v287 = vunpack.c.l.b16 %v200
    %v288 = vunpack.c.h.b16 %v200
    %v289 = vunpack.c.l.b16 %v201
    %v290 = vunpack.c.h.b16 %v201
    %v291 = vunpack.c.l.b16 %v202
    %v292 = vunpack.c.h.b16 %v202
    %v293 = vunpack.c.l.b16 %v203
    %v294 = vunpack.c.h.b16 %v203
    %v295 = vunpack.c.l.b16 %v204
    %v296 = vunpack.c.h.b16 %v204
    %v297 = vunpack.c.l.b16 %v205
    %v298 = vunpack.c.h.b16 %v205
    %v299 = vunpack.c.l.b16 %v206
    %v300 = vunpack.c.h.b16 %v206
    %v301 = vunpack.c.l.b16 %v207
    %v302 = vunpack.c.h.b16 %v207
    %v303 = vunpack.c.l.b16 %v208
    %v304 = vunpack.c.h.b16 %v208
    %v305 = vpack.c.b16 %v243, %v241
    %v306 = vpack.c.b16 %v244, %v242
    %v307 = vpack.c.b16 %v247, %v245
    %v308 = vpack.c.b16 %v248, %v246
    %v309 = vpack.c.b16 %v251, %v249
    %v310 = vpack.c.b16 %v252, %v250
    %v311 = vpack.c.b16 %v255, %v253
    %v312 = vpack.c.b16 %v256, %v254
    %v313 = vpack.c.b16 %v259, %v257
    %v314 = vpack.c.b16 %v260, %v258
    %v315 = vpack.c.b16 %v263, %v261
    %v316 = vpack.c.b16 %v264, %v262
    %v317 = vpack.c.b16 %v267, %v265
    %v318 = vpack.c.b16 %v268, %v266
    %v319 = vpack.c.b16 %v271, %v269
    %v320 = vpack.c.b16 %v272, %v270
    %v321 = vpack.c.b16 %v275, %v273
    %v322 = vpack.c.b16 %v276, %v274
    %v323 = vpack.c.b16 %v279, %v277
    %v324 = vpack.c.b16 %v280, %v278
    %v325 = vpack.c.b16 %v283, %v281
    %v326 = vpack.c.b16 %v284, %v282
    %v327 = vpack.c.b16 %v287, %v285
    %v328 = vpack.c.b16 %v288, %v286
    %v329 = vpack.c.b16 %v291, %v289
    %v330 = vpack.c.b16 %v292, %v290
    %v331 = vpack.c.b16 %v295, %v293
    %v332 = vpack.c.b16 %v296, %v294
    %v333 = vpack.c.b16 %v299, %v297
    %v334 = vpack.c.b16 %v300, %v298
    %v335 = vpack.c.b16 %v303, %v301
    %v336 = vpack.c.b16 %v304, %v302
    %v401 = vunpack.c.l.b16 %v113
    %v402 = vunpack.c.l.b16 %v114
    %v403 = vunpack.c.l.b16 %v115
    %v404 = vunpack.c.l.b16 %v116
    %v405 = vunpack.c.l.b16 %v117
    %v406 = vunpack.c.l.b16 %v118
    %v407 = vunpack.c.l.b16 %v119
    %v408 = vunpack.c.l.b16 %v120
    %v409 = vunpack.c.l.b16 %v121
    %v410 = vunpack.c.l.b16 %v122
    %v411 = vunpack.c.l.b16 %v123
    %v412 = vunpack.c.l.b16 %v124
    %v413 = vunpack.c.l.b16 %v125
    %v414 = vunpack.c.l.b16 %v126
    %v415 = vunpack.c.l.b16 %v127
    %v416 = vunpack.c.l.b16 %v128
    %v417 = vunpack.c.l.b16 %v129
    %v418 = vunpack.c.l.b16 %v130
    %v419 = vunpack.c.l.b16 %v131
    %v420 = vunpack.c.l.b16 %v132
    %v421 = vunpack.c.l.b16 %v133
    %v422 = vunpack.c.l.b16 %v134
    %v423 = vunpack.c.l.b16 %v135
    %v424 = vunpack.c.l.b16 %v136
    %v425 = vunpack.c.l.b16 %v137
    %v426 = vunpack.c.l.b16 %v138
    %v427 = vunpack.c.l.b16 %v139
    %v428 = vunpack.c.l.b16 %v140
    %v429 = vunpack.c.l.b16 %v141
    %v430 = vunpack.c.l.b16 %v142
    %v431 = vunpack.c.l.b16 %v143
    %v432 = vunpack.c.l.b16 %v144
    %v433 = vpack.c.b16 %v402, %v401
    %v434 = vpack.c.b16 %v404, %v403
    %v435 = vpack.c.b16 %v406, %v405
    %v436 = vpack.c.b16 %v408, %v407
    %v437 = vpack.c.b16 %v410, %v409
    %v438 = vpack.c.b16 %v412, %v411
    %v439 = vpack.c.b16 %v414, %v413
    %v440 = vpack.c.b16 %v416, %v415
    %v441 = vpack.c.b16 %v418, %v417
    %v442 = vpack.c.b16 %v420, %v419
    %v443 = vpack.c.b16 %v422, %v421
    %v444 = vpack.c.b16 %v424, %v423
    %v445 = vpack.c.b16 %v426, %v425
    %v446 = vpack.c.b16 %v428, %v427
    %v447 = vpack.c.b16 %v430, %v429
    %v448 = vpack.c.b16 %v432, %v431
    %465 = vmatprep.subr.bf16.mxu0 0
    %466 = vmatpush1.bf16.msra.mxu0 %v433
    %467 = vmatprep.subr.bf16.mxu0 0
    %468 = vmatpush1.bf16.msra.mxu0 %v434
    %469 = vmatprep.subr.bf16.mxu0 0
    %470 = vmatpush1.bf16.msra.mxu0 %v435
    %471 = vmatprep.subr.bf16.mxu0 0
    %472 = vmatpush1.bf16.msra.mxu0 %v436
    %473 = vmatprep.subr.bf16.mxu0 0
    %474 = vmatpush1.bf16.msra.mxu0 %v437
    %475 = vmatprep.subr.bf16.mxu0 0
    %476 = vmatpush1.bf16.msra.mxu0 %v438
    %477 = vmatprep.subr.bf16.mxu0 0
    %478 = vmatpush1.bf16.msra.mxu0 %v439
    %479 = vmatprep.subr.bf16.mxu0 0
    %480 = vmatpush1.bf16.msra.mxu0 %v440
    %481 = vmatprep.subr.bf16.mxu0 0
    %482 = vmatpush1.bf16.msra.mxu0 %v441
    %483 = vmatprep.subr.bf16.mxu0 0
    %484 = vmatpush1.bf16.msra.mxu0 %v442
    %485 = vmatprep.subr.bf16.mxu0 0
    %486 = vmatpush1.bf16.msra.mxu0 %v443
    %487 = vmatprep.subr.bf16.mxu0 0
    %488 = vmatpush1.bf16.msra.mxu0 %v444
    %489 = vmatprep.subr.bf16.mxu0 0
    %490 = vmatpush1.bf16.msra.mxu0 %v445
    %491 = vmatprep.subr.bf16.mxu0 0
    %492 = vmatpush1.bf16.msra.mxu0 %v446
    %493 = vmatprep.subr.bf16.mxu0 0
    %494 = vmatpush1.bf16.msra.mxu0 %v447
    %495 = vmatprep.subr.bf16.mxu0 0
    %496 = vmatpush1.bf16.msra.mxu0 %v448
    %497 = vmatprep.mubr.bf16.mxu0 %v306
    %498 = vmatmul.mubr.bf16.gmra.mrb[0].mxu0 %v305
    %v499 = vpop.f32.mrb[0].mxu0
    %v500 = vadd.f32 0.0, %v499
    %v501 = vpop.f32.mrb[0].mxu0
    %v502 = vpop.f32.mrb[0].mxu0
    %v503 = vadd.f32 0.0, %v502
    %v504 = vpop.f32.mrb[0].mxu0
    %505 = vmatprep.mubr.bf16.mxu0 %v308
    %506 = vmatmul.mubr.bf16.gmra.mrb[0].mxu0 %v307
    %v507 = vpop.f32.mrb[0].mxu0
    %v508 = vadd.f32 0.0, %v507
    %v509 = vpop.f32.mrb[0].mxu0
    %v510 = vpop.f32.mrb[0].mxu0
    %v511 = vadd.f32 0.0, %v510
    %v512 = vpop.f32.mrb[0].mxu0
    %513 = vmatprep.mubr.bf16.mxu0 %v310
    %514 = vmatmul.mubr.bf16.gmra.mrb[0].mxu0 %v309
    %v515 = vpop.f32.mrb[0].mxu0
    %v516 = vadd.f32 0.0, %v515
    %v517 = vpop.f32.mrb[0].mxu0
    %v518 = vpop.f32.mrb[0].mxu0
    %v519 = vadd.f32 0.0, %v518
    %v520 = vpop.f32.mrb[0].mxu0
    %521 = vmatprep.mubr.bf16.mxu0 %v312
    %522 = vmatmul.mubr.bf16.gmra.mrb[0].mxu0 %v311
    %v523 = vpop.f32.mrb[0].mxu0
    %v524 = vadd.f32 0.0, %v523
    %v525 = vpop.f32.mrb[0].mxu0
    %v526 = vpop.f32.mrb[0].mxu0
    %v527 = vadd.f32 0.0, %v526
    %v528 = vpop.f32.mrb[0].mxu0
    %529 = vmatprep.mubr.bf16.mxu0 %v314
    %530 = vmatmul.mubr.bf16.gmra.mrb[0].mxu0 %v313
    %v531 = vpop.f32.mrb[0].mxu0
    %v532 = vadd.f32 0.0, %v531
    %v533 = vpop.f32.mrb[0].mxu0
    %v534 = vpop.f32.mrb[0].mxu0
    %v535 = vadd.f32 0.0, %v534
    %v536 = vpop.f32.mrb[0].mxu0
    %537 = vmatprep.mubr.bf16.mxu0 %v316
    %538 = vmatmul.mubr.bf16.gmra.mrb[0].mxu0 %v315
    %v539 = vpop.f32.mrb[0].mxu0
    %v540 = vadd.f32 0.0, %v539
    %v541 = vpop.f32.mrb[0].mxu0
    %v542 = vpop.f32.mrb[0].mxu0
    %v543 = vadd.f32 0.0, %v542
    %v544 = vpop.f32.mrb[0].mxu0
    %545 = vmatprep.mubr.bf16.mxu0 %v318
    %546 = vmatmul.mubr.bf16.gmra.mrb[0].mxu0 %v317
    %v547 = vpop.f32.mrb[0].mxu0
    %v548 = vadd.f32 0.0, %v547
    %v549 = vpop.f32.mrb[0].mxu0
    %v550 = vpop.f32.mrb[0].mxu0
    %v551 = vadd.f32 0.0, %v550
    %v552 = vpop.f32.mrb[0].mxu0
    %553 = vmatprep.mubr.bf16.mxu0 %v320
    %554 = vmatmul.mubr.bf16.gmra.mrb[0].mxu0 %v319
    %v555 = vpop.f32.mrb[0].mxu0
    %v556 = vadd.f32 0.0, %v555
    %v557 = vpop.f32.mrb[0].mxu0
    %v558 = vpop.f32.mrb[0].mxu0
    %v559 = vadd.f32 0.0, %v558
    %v560 = vpop.f32.mrb[0].mxu0
    %561 = vmatprep.mubr.bf16.mxu0 %v322
    %562 = vmatmul.mubr.bf16.gmra.mrb[0].mxu0 %v321
    %v563 = vpop.f32.mrb[0].mxu0
    %v564 = vadd.f32 0.0, %v563
    %v565 = vpop.f32.mrb[0].mxu0
    %v566 = vpop.f32.mrb[0].mxu0
    %v567 = vadd.f32 0.0, %v566
    %v568 = vpop.f32.mrb[0].mxu0
    %569 = vmatprep.mubr.bf16.mxu0 %v324
    %570 = vmatmul.mubr.bf16.gmra.mrb[0].mxu0 %v323
    %v571 = vpop.f32.mrb[0].mxu0
    %v572 = vadd.f32 0.0, %v571
    %v573 = vpop.f32.mrb[0].mxu0
    %v574 = vpop.f32.mrb[0].mxu0
    %v575 = vadd.f32 0.0, %v574
    %v576 = vpop.f32.mrb[0].mxu0
    %577 = vmatprep.mubr.bf16.mxu0 %v326
    %578 = vmatmul.mubr.bf16.gmra.mrb[0].mxu0 %v325
    %v579 = vpop.f32.mrb[0].mxu0
    %v580 = vadd.f32 0.0, %v579
    %v581 = vpop.f32.mrb[0].mxu0
    %v582 = vpop.f32.mrb[0].mxu0
    %v583 = vadd.f32 0.0, %v582
    %v584 = vpop.f32.mrb[0].mxu0
    %585 = vmatprep.mubr.bf16.mxu0 %v328
    %586 = vmatmul.mubr.bf16.gmra.mrb[0].mxu0 %v327
    %v587 = vpop.f32.mrb[0].mxu0
    %v588 = vadd.f32 0.0, %v587
    %v589 = vpop.f32.mrb[0].mxu0
    %v590 = vpop.f32.mrb[0].mxu0
    %v591 = vadd.f32 0.0, %v590
    %v592 = vpop.f32.mrb[0].mxu0
    %593 = vmatprep.mubr.bf16.mxu0 %v330
    %594 = vmatmul.mubr.bf16.gmra.mrb[0].mxu0 %v329
    %v595 = vpop.f32.mrb[0].mxu0
    %v596 = vadd.f32 0.0, %v595
    %v597 = vpop.f32.mrb[0].mxu0
    %v598 = vpop.f32.mrb[0].mxu0
    %v599 = vadd.f32 0.0, %v598
    %v600 = vpop.f32.mrb[0].mxu0
    %601 = vmatprep.mubr.bf16.mxu0 %v332
    %602 = vmatmul.mubr.bf16.gmra.mrb[0].mxu0 %v331
    %v603 = vpop.f32.mrb[0].mxu0
    %v604 = vadd.f32 0.0, %v603
    %v605 = vpop.f32.mrb[0].mxu0
    %v606 = vpop.f32.mrb[0].mxu0
    %v607 = vadd.f32 0.0, %v606
    %v608 = vpop.f32.mrb[0].mxu0
    %609 = vmatprep.mubr.bf16.mxu0 %v334
    %610 = vmatmul.mubr.bf16.gmra.mrb[0].mxu0 %v333
    %v611 = vpop.f32.mrb[0].mxu0
    %v612 = vadd.f32 0.0, %v611
    %v613 = vpop.f32.mrb[0].mxu0
    %v614 = vpop.f32.mrb[0].mxu0
    %v615 = vadd.f32 0.0, %v614
    %v616 = vpop.f32.mrb[0].mxu0
    %617 = vmatprep.mubr.bf16.mxu0 %v336
    %618 = vmatmul.mubr.bf16.gmra.mrb[0].mxu0 %v335
    %v619 = vpop.f32.mrb[0].mxu0
    %v620 = vadd.f32 0.0, %v619
    %v621 = vpop.f32.mrb[0].mxu0
    %v622 = vpop.f32.mrb[0].mxu0
    %v623 = vadd.f32 0.0, %v622
    %v624 = vpop.f32.mrb[0].mxu0
    %625 = vdwg.mxu0
    %v626 = vadd.f32 %v145, %v500
    %v627 = vadd.f32 %v146, %v503
    %v628 = vadd.f32 %v147, %v508
    %v629 = vadd.f32 %v148, %v511
    %v630 = vadd.f32 %v149, %v516
    %v631 = vadd.f32 %v150, %v519
    %v632 = vadd.f32 %v151, %v524
    %v633 = vadd.f32 %v152, %v527
    %v634 = vadd.f32 %v153, %v532
    %v635 = vadd.f32 %v154, %v535
    %v636 = vadd.f32 %v155, %v540
    %v637 = vadd.f32 %v156, %v543
    %v638 = vadd.f32 %v157, %v548
    %v639 = vadd.f32 %v158, %v551
    %v640 = vadd.f32 %v159, %v556
    %v641 = vadd.f32 %v160, %v559
    %v642 = vadd.f32 %v161, %v564
    %v643 = vadd.f32 %v162, %v567
    %v644 = vadd.f32 %v163, %v572
    %v645 = vadd.f32 %v164, %v575
    %v646 = vadd.f32 %v165, %v580
    %v647 = vadd.f32 %v166, %v583
    %v648 = vadd.f32 %v167, %v588
    %v649 = vadd.f32 %v168, %v591
    %v650 = vadd.f32 %v169, %v596
    %v651 = vadd.f32 %v170, %v599
    %v652 = vadd.f32 %v171, %v604
    %v653 = vadd.f32 %v172, %v607
    %v654 = vadd.f32 %v173, %v612
    %v655 = vadd.f32 %v174, %v615
    %v656 = vadd.f32 %v175, %v620
    %v657 = vadd.f32 %v176, %v623
    %658 = vst [vmem:[#allocation2] sm:$0xff] %v626
    %659 = vst [vmem:[#allocation2 + $0x8] sm:$0xff] %v627
    %660 = vst [vmem:[#allocation2 + $0x10] sm:$0xff] %v628
    %661 = vst [vmem:[#allocation2 + $0x18] sm:$0xff] %v629
    %662 = vst [vmem:[#allocation2 + $0x20] sm:$0xff] %v630
    %663 = vst [vmem:[#allocation2 + $0x28] sm:$0xff] %v631
    %664 = vst [vmem:[#allocation2 + $0x30] sm:$0xff] %v632
    %665 = vst [vmem:[#allocation2 + $0x38] sm:$0xff] %v633
    %666 = vst [vmem:[#allocation2 + $0x40] sm:$0xff] %v634
    %667 = vst [vmem:[#allocation2 + $0x48] sm:$0xff] %v635
    %668 = vst [vmem:[#allocation2 + $0x50] sm:$0xff] %v636
    %669 = vst [vmem:[#allocation2 + $0x58] sm:$0xff] %v637
    %670 = vst [vmem:[#allocation2 + $0x60] sm:$0xff] %v638
    %671 = vst [vmem:[#allocation2 + $0x68] sm:$0xff] %v639
    %672 = vst [vmem:[#allocation2 + $0x70] sm:$0xff] %v640
    %673 = vst [vmem:[#allocation2 + $0x78] sm:$0xff] %v641
    %674 = vst [vmem:[#allocation2 + $0x80] sm:$0xff] %v642
    %675 = vst [vmem:[#allocation2 + $0x88] sm:$0xff] %v643
    %676 = vst [vmem:[#allocation2 + $0x90] sm:$0xff] %v644
    %677 = vst [vmem:[#allocation2 + $0x98] sm:$0xff] %v645
    %678 = vst [vmem:[#allocation2 + $0xa0] sm:$0xff] %v646
    %679 = vst [vmem:[#allocation2 + $0xa8] sm:$0xff] %v647
    %680 = vst [vmem:[#allocation2 + $0xb0] sm:$0xff] %v648
    %681 = vst [vmem:[#allocation2 + $0xb8] sm:$0xff] %v649
    %682 = vst [vmem:[#allocation2 + $0xc0] sm:$0xff] %v650
    %683 = vst [vmem:[#allocation2 + $0xc8] sm:$0xff] %v651
    %684 = vst [vmem:[#allocation2 + $0xd0] sm:$0xff] %v652
    %685 = vst [vmem:[#allocation2 + $0xd8] sm:$0xff] %v653
    %686 = vst [vmem:[#allocation2 + $0xe0] sm:$0xff] %v654
    %687 = vst [vmem:[#allocation2 + $0xe8] sm:$0xff] %v655
    %688 = vst [vmem:[#allocation2 + $0xf0] sm:$0xff] %v656
    %689 = vst [vmem:[#allocation2 + $0xf8] sm:$0xff] %v657
    // Predicated region
    $region50: #{tpu_custom_call.1} parent=1 // pred_check
      %p690 = pneg %p72
    $region51: #{tpu_custom_call.1} parent=1 // pred_check_branch
      %692 = sbr.rel (%p690) target = $region53
    $region52: #{tpu_custom_call.1} parent=1 // pred_region
      %v693 = vld [vmem:[#allocation2] sm:$0xff]
      %v694 = vld [vmem:[#allocation2 + $0x8] sm:$0xff]
      %v695 = vld [vmem:[#allocation2 + $0x10] sm:$0xff]
      %v696 = vld [vmem:[#allocation2 + $0x18] sm:$0xff]
      %v697 = vld [vmem:[#allocation2 + $0x20] sm:$0xff]
      %v698 = vld [vmem:[#allocation2 + $0x28] sm:$0xff]
      %v699 = vld [vmem:[#allocation2 + $0x30] sm:$0xff]
      %v700 = vld [vmem:[#allocation2 + $0x38] sm:$0xff]
      %v701 = vld [vmem:[#allocation2 + $0x40] sm:$0xff]
      %v702 = vld [vmem:[#allocation2 + $0x48] sm:$0xff]
      %v703 = vld [vmem:[#allocation2 + $0x50] sm:$0xff]
      %v704 = vld [vmem:[#allocation2 + $0x58] sm:$0xff]
      %v705 = vld [vmem:[#allocation2 + $0x60] sm:$0xff]
      %v706 = vld [vmem:[#allocation2 + $0x68] sm:$0xff]
      %v707 = vld [vmem:[#allocation2 + $0x70] sm:$0xff]
      %v708 = vld [vmem:[#allocation2 + $0x78] sm:$0xff]
      %v709 = vld [vmem:[#allocation2 + $0x80] sm:$0xff]
      %v710 = vld [vmem:[#allocation2 + $0x88] sm:$0xff]
      %v711 = vld [vmem:[#allocation2 + $0x90] sm:$0xff]
      %v712 = vld [vmem:[#allocation2 + $0x98] sm:$0xff]
      %v713 = vld [vmem:[#allocation2 + $0xa0] sm:$0xff]
      %v714 = vld [vmem:[#allocation2 + $0xa8] sm:$0xff]
      %v715 = vld [vmem:[#allocation2 + $0xb0] sm:$0xff]
      %v716 = vld [vmem:[#allocation2 + $0xb8] sm:$0xff]
      %v717 = vld [vmem:[#allocation2 + $0xc0] sm:$0xff]
      %v718 = vld [vmem:[#allocation2 + $0xc8] sm:$0xff]
      %v719 = vld [vmem:[#allocation2 + $0xd0] sm:$0xff]
      %v720 = vld [vmem:[#allocation2 + $0xd8] sm:$0xff]
      %v721 = vld [vmem:[#allocation2 + $0xe0] sm:$0xff]
      %v722 = vld [vmem:[#allocation2 + $0xe8] sm:$0xff]
      %v723 = vld [vmem:[#allocation2 + $0xf0] sm:$0xff]
      %v724 = vld [vmem:[#allocation2 + $0xf8] sm:$0xff]
      %v725 = vld [vmem:[%s3] sm:$0xff]
      %v726 = vld [vmem:[%s3 + $0x8] sm:$0xff]
      %v727 = vld [vmem:[%s3 + $0x10] sm:$0xff]
      %v728 = vld [vmem:[%s3 + $0x18] sm:$0xff]
      %v729 = vld [vmem:[%s3 + $0x20] sm:$0xff]
      %v730 = vld [vmem:[%s3 + $0x28] sm:$0xff]
      %v731 = vld [vmem:[%s3 + $0x30] sm:$0xff]
      %v732 = vld [vmem:[%s3 + $0x38] sm:$0xff]
      %v733 = vld [vmem:[%s3 + $0x40] sm:$0xff]
      %v734 = vld [vmem:[%s3 + $0x48] sm:$0xff]
      %v735 = vld [vmem:[%s3 + $0x50] sm:$0xff]
      %v736 = vld [vmem:[%s3 + $0x58] sm:$0xff]
      %v737 = vld [vmem:[%s3 + $0x60] sm:$0xff]
      %v738 = vld [vmem:[%s3 + $0x68] sm:$0xff]
      %v739 = vld [vmem:[%s3 + $0x70] sm:$0xff]
      %v740 = vld [vmem:[%s3 + $0x78] sm:$0xff]
      %v741 = vld [vmem:[%s3 + $0x80] sm:$0xff]
      %v742 = vld [vmem:[%s3 + $0x88] sm:$0xff]
      %v743 = vld [vmem:[%s3 + $0x90] sm:$0xff]
      %v744 = vld [vmem:[%s3 + $0x98] sm:$0xff]
      %v745 = vld [vmem:[%s3 + $0xa0] sm:$0xff]
      %v746 = vld [vmem:[%s3 + $0xa8] sm:$0xff]
      %v747 = vld [vmem:[%s3 + $0xb0] sm:$0xff]
      %v748 = vld [vmem:[%s3 + $0xb8] sm:$0xff]
      %v749 = vld [vmem:[%s3 + $0xc0] sm:$0xff]
      %v750 = vld [vmem:[%s3 + $0xc8] sm:$0xff]
      %v751 = vld [vmem:[%s3 + $0xd0] sm:$0xff]
      %v752 = vld [vmem:[%s3 + $0xd8] sm:$0xff]
      %v753 = vld [vmem:[%s3 + $0xe0] sm:$0xff]
      %v754 = vld [vmem:[%s3 + $0xe8] sm:$0xff]
      %v755 = vld [vmem:[%s3 + $0xf0] sm:$0xff]
      %v756 = vld [vmem:[%s3 + $0xf8] sm:$0xff]
      %758 = vset.pattern.permute.xlu0 0
      %759 = vperm.xlu0 %758, %v725
      %v760 = vpop.permute.xlu0 %759
      %763 = vset.pattern.permute.xlu0 0
      %764 = vperm.xlu0 %763, %v726
      %v765 = vpop.permute.xlu0 %764
      %768 = vset.pattern.permute.xlu0 0
      %769 = vperm.xlu0 %768, %v727
      %v770 = vpop.permute.xlu0 %769
      %773 = vset.pattern.permute.xlu0 0
      %774 = vperm.xlu0 %773, %v728
      %v775 = vpop.permute.xlu0 %774
      %778 = vset.pattern.permute.xlu0 0
      %779 = vperm.xlu0 %778, %v729
      %v780 = vpop.permute.xlu0 %779
      %783 = vset.pattern.permute.xlu0 0
      %784 = vperm.xlu0 %783, %v730
      %v785 = vpop.permute.xlu0 %784
      %788 = vset.pattern.permute.xlu0 0
      %789 = vperm.xlu0 %788, %v731
      %v790 = vpop.permute.xlu0 %789
      %793 = vset.pattern.permute.xlu0 0
      %794 = vperm.xlu0 %793, %v732
      %v795 = vpop.permute.xlu0 %794
      %798 = vset.pattern.permute.xlu0 0
      %799 = vperm.xlu0 %798, %v733
      %v800 = vpop.permute.xlu0 %799
      %803 = vset.pattern.permute.xlu0 0
      %804 = vperm.xlu0 %803, %v734
      %v805 = vpop.permute.xlu0 %804
      %808 = vset.pattern.permute.xlu0 0
      %809 = vperm.xlu0 %808, %v735
      %v810 = vpop.permute.xlu0 %809
      %813 = vset.pattern.permute.xlu0 0
      %814 = vperm.xlu0 %813, %v736
      %v815 = vpop.permute.xlu0 %814
      %818 = vset.pattern.permute.xlu0 0
      %819 = vperm.xlu0 %818, %v737
      %v820 = vpop.permute.xlu0 %819
      %823 = vset.pattern.permute.xlu0 0
      %824 = vperm.xlu0 %823, %v738
      %v825 = vpop.permute.xlu0 %824
      %828 = vset.pattern.permute.xlu0 0
      %829 = vperm.xlu0 %828, %v739
      %v830 = vpop.permute.xlu0 %829
      %833 = vset.pattern.permute.xlu0 0
      %834 = vperm.xlu0 %833, %v740
      %v835 = vpop.permute.xlu0 %834
      %838 = vset.pattern.permute.xlu0 0
      %839 = vperm.xlu0 %838, %v741
      %v840 = vpop.permute.xlu0 %839
      %843 = vset.pattern.permute.xlu0 0
      %844 = vperm.xlu0 %843, %v742
      %v845 = vpop.permute.xlu0 %844
      %848 = vset.pattern.permute.xlu0 0
      %849 = vperm.xlu0 %848, %v743
      %v850 = vpop.permute.xlu0 %849
      %853 = vset.pattern.permute.xlu0 0
      %854 = vperm.xlu0 %853, %v744
      %v855 = vpop.permute.xlu0 %854
      %858 = vset.pattern.permute.xlu0 0
      %859 = vperm.xlu0 %858, %v745
      %v860 = vpop.permute.xlu0 %859
      %863 = vset.pattern.permute.xlu0 0
      %864 = vperm.xlu0 %863, %v746
      %v865 = vpop.permute.xlu0 %864
      %868 = vset.pattern.permute.xlu0 0
      %869 = vperm.xlu0 %868, %v747
      %v870 = vpop.permute.xlu0 %869
      %873 = vset.pattern.permute.xlu0 0
      %874 = vperm.xlu0 %873, %v748
      %v875 = vpop.permute.xlu0 %874
      %878 = vset.pattern.permute.xlu0 0
      %879 = vperm.xlu0 %878, %v749
      %v880 = vpop.permute.xlu0 %879
      %883 = vset.pattern.permute.xlu0 0
      %884 = vperm.xlu0 %883, %v750
      %v885 = vpop.permute.xlu0 %884
      %888 = vset.pattern.permute.xlu0 0
      %889 = vperm.xlu0 %888, %v751
      %v890 = vpop.permute.xlu0 %889
      %893 = vset.pattern.permute.xlu0 0
      %894 = vperm.xlu0 %893, %v752
      %v895 = vpop.permute.xlu0 %894
      %898 = vset.pattern.permute.xlu0 0
      %899 = vperm.xlu0 %898, %v753
      %v900 = vpop.permute.xlu0 %899
      %903 = vset.pattern.permute.xlu0 0
      %904 = vperm.xlu0 %903, %v754
      %v905 = vpop.permute.xlu0 %904
      %908 = vset.pattern.permute.xlu0 0
      %909 = vperm.xlu0 %908, %v755
      %v910 = vpop.permute.xlu0 %909
      %913 = vset.pattern.permute.xlu0 0
      %914 = vperm.xlu0 %913, %v756
      %v915 = vpop.permute.xlu0 %914
      %v917 = vmul.f32 %v693, %v760
      %v918 = vmul.f32 %v694, %v765
      %v919 = vmul.f32 %v695, %v770
      %v920 = vmul.f32 %v696, %v775
      %v921 = vmul.f32 %v697, %v780
      %v922 = vmul.f32 %v698, %v785
      %v923 = vmul.f32 %v699, %v790
      %v924 = vmul.f32 %v700, %v795
      %v925 = vmul.f32 %v701, %v800
      %v926 = vmul.f32 %v702, %v805
      %v927 = vmul.f32 %v703, %v810
      %v928 = vmul.f32 %v704, %v815
      %v929 = vmul.f32 %v705, %v820
      %v930 = vmul.f32 %v706, %v825
      %v931 = vmul.f32 %v707, %v830
      %v932 = vmul.f32 %v708, %v835
      %v933 = vmul.f32 %v709, %v840
      %v934 = vmul.f32 %v710, %v845
      %v935 = vmul.f32 %v711, %v850
      %v936 = vmul.f32 %v712, %v855
      %v937 = vmul.f32 %v713, %v860
      %v938 = vmul.f32 %v714, %v865
      %v939 = vmul.f32 %v715, %v870
      %v940 = vmul.f32 %v716, %v875
      %v941 = vmul.f32 %v717, %v880
      %v942 = vmul.f32 %v718, %v885
      %v943 = vmul.f32 %v719, %v890
      %v944 = vmul.f32 %v720, %v895
      %v945 = vmul.f32 %v721, %v900
      %v946 = vmul.f32 %v722, %v905
      %v947 = vmul.f32 %v723, %v910
      %v948 = vmul.f32 %v724, %v915
      %v949 = vpack.c.bf16 %v918, %v917
      %v950 = vpack.c.bf16 %v920, %v919
      %v951 = vpack.c.bf16 %v922, %v921
      %v952 = vpack.c.bf16 %v924, %v923
      %v953 = vpack.c.bf16 %v926, %v925
      %v954 = vpack.c.bf16 %v928, %v927
      %v955 = vpack.c.bf16 %v930, %v929
      %v956 = vpack.c.bf16 %v932, %v931
      %v957 = vpack.c.bf16 %v934, %v933
      %v958 = vpack.c.bf16 %v936, %v935
      %v959 = vpack.c.bf16 %v938, %v937
      %v960 = vpack.c.bf16 %v940, %v939
      %v961 = vpack.c.bf16 %v942, %v941
      %v962 = vpack.c.bf16 %v944, %v943
      %v963 = vpack.c.bf16 %v946, %v945
      %v964 = vpack.c.bf16 %v948, %v947
      %v965 = vld [vmem:[#allocation6] sm:$0xf]
      %v966 = vld [vmem:[#allocation6 + $0x4] sm:$0xf]
      %v967 = vld [vmem:[#allocation6 + $0x8] sm:$0xf]
      %v968 = vld [vmem:[#allocation6 + $0xc] sm:$0xf]
      %v969 = vld [vmem:[#allocation6 + $0x10] sm:$0xf]
      %v970 = vld [vmem:[#allocation6 + $0x14] sm:$0xf]
      %v971 = vld [vmem:[#allocation6 + $0x18] sm:$0xf]
      %v972 = vld [vmem:[#allocation6 + $0x1c] sm:$0xf]
      %v973 = vld [vmem:[#allocation6 + $0x20] sm:$0xf]
      %v974 = vld [vmem:[#allocation6 + $0x24] sm:$0xf]
      %v975 = vld [vmem:[#allocation6 + $0x28] sm:$0xf]
      %v976 = vld [vmem:[#allocation6 + $0x2c] sm:$0xf]
      %v977 = vld [vmem:[#allocation6 + $0x30] sm:$0xf]
      %v978 = vld [vmem:[#allocation6 + $0x34] sm:$0xf]
      %v979 = vld [vmem:[#allocation6 + $0x38] sm:$0xf]
      %v980 = vld [vmem:[#allocation6 + $0x3c] sm:$0xf]
      %v981 = vld [vmem:[#allocation6 + $0x40] sm:$0xf]
      %v982 = vld [vmem:[#allocation6 + $0x44] sm:$0xf]
      %v983 = vld [vmem:[#allocation6 + $0x48] sm:$0xf]
      %v984 = vld [vmem:[#allocation6 + $0x4c] sm:$0xf]
      %v985 = vld [vmem:[#allocation6 + $0x50] sm:$0xf]
      %v986 = vld [vmem:[#allocation6 + $0x54] sm:$0xf]
      %v987 = vld [vmem:[#allocation6 + $0x58] sm:$0xf]
      %v988 = vld [vmem:[#allocation6 + $0x5c] sm:$0xf]
      %v989 = vld [vmem:[#allocation6 + $0x60] sm:$0xf]
      %v990 = vld [vmem:[#allocation6 + $0x64] sm:$0xf]
      %v991 = vld [vmem:[#allocation6 + $0x68] sm:$0xf]
      %v992 = vld [vmem:[#allocation6 + $0x6c] sm:$0xf]
      %v993 = vld [vmem:[#allocation6 + $0x70] sm:$0xf]
      %v994 = vld [vmem:[#allocation6 + $0x74] sm:$0xf]
      %v995 = vld [vmem:[#allocation6 + $0x78] sm:$0xf]
      %v996 = vld [vmem:[#allocation6 + $0x7c] sm:$0xf]
      %v1029 = vunpack.c.l.b16 %v965
      %v1030 = vunpack.c.l.b16 %v966
      %v1031 = vunpack.c.l.b16 %v967
      %v1032 = vunpack.c.l.b16 %v968
      %v1033 = vunpack.c.l.b16 %v969
      %v1034 = vunpack.c.l.b16 %v970
      %v1035 = vunpack.c.l.b16 %v971
      %v1036 = vunpack.c.l.b16 %v972
      %v1037 = vunpack.c.l.b16 %v973
      %v1038 = vunpack.c.l.b16 %v974
      %v1039 = vunpack.c.l.b16 %v975
      %v1040 = vunpack.c.l.b16 %v976
      %v1041 = vunpack.c.l.b16 %v977
      %v1042 = vunpack.c.l.b16 %v978
      %v1043 = vunpack.c.l.b16 %v979
      %v1044 = vunpack.c.l.b16 %v980
      %v1045 = vunpack.c.l.b16 %v981
      %v1046 = vunpack.c.l.b16 %v982
      %v1047 = vunpack.c.l.b16 %v983
      %v1048 = vunpack.c.l.b16 %v984
      %v1049 = vunpack.c.l.b16 %v985
      %v1050 = vunpack.c.l.b16 %v986
      %v1051 = vunpack.c.l.b16 %v987
      %v1052 = vunpack.c.l.b16 %v988
      %v1053 = vunpack.c.l.b16 %v989
      %v1054 = vunpack.c.l.b16 %v990
      %v1055 = vunpack.c.l.b16 %v991
      %v1056 = vunpack.c.l.b16 %v992
      %v1057 = vunpack.c.l.b16 %v993
      %v1058 = vunpack.c.l.b16 %v994
      %v1059 = vunpack.c.l.b16 %v995
      %v1060 = vunpack.c.l.b16 %v996
      %v1061 = vpack.c.b16 %v1030, %v1029
      %v1062 = vpack.c.b16 %v1032, %v1031
      %v1063 = vpack.c.b16 %v1034, %v1033
      %v1064 = vpack.c.b16 %v1036, %v1035
      %v1065 = vpack.c.b16 %v1038, %v1037
      %v1066 = vpack.c.b16 %v1040, %v1039
      %v1067 = vpack.c.b16 %v1042, %v1041
      %v1068 = vpack.c.b16 %v1044, %v1043
      %v1069 = vpack.c.b16 %v1046, %v1045
      %v1070 = vpack.c.b16 %v1048, %v1047
      %v1071 = vpack.c.b16 %v1050, %v1049
      %v1072 = vpack.c.b16 %v1052, %v1051
      %v1073 = vpack.c.b16 %v1054, %v1053
      %v1074 = vpack.c.b16 %v1056, %v1055
      %v1075 = vpack.c.b16 %v1058, %v1057
      %v1076 = vpack.c.b16 %v1060, %v1059
      %v1093 = vld [vmem:[#allocation8] sm:$0xf]
      %v1094 = vld [vmem:[#allocation8 + $0x4] sm:$0xf]
      %v1095 = vld [vmem:[#allocation8 + $0x8] sm:$0xf]
      %v1096 = vld [vmem:[#allocation8 + $0xc] sm:$0xf]
      %v1097 = vld [vmem:[#allocation8 + $0x10] sm:$0xf]
      %v1098 = vld [vmem:[#allocation8 + $0x14] sm:$0xf]
      %v1099 = vld [vmem:[#allocation8 + $0x18] sm:$0xf]
      %v1100 = vld [vmem:[#allocation8 + $0x1c] sm:$0xf]
      %v1101 = vld [vmem:[#allocation8 + $0x20] sm:$0xf]
      %v1102 = vld [vmem:[#allocation8 + $0x24] sm:$0xf]
      %v1103 = vld [vmem:[#allocation8 + $0x28] sm:$0xf]
      %v1104 = vld [vmem:[#allocation8 + $0x2c] sm:$0xf]
      %v1105 = vld [vmem:[#allocation8 + $0x30] sm:$0xf]
      %v1106 = vld [vmem:[#allocation8 + $0x34] sm:$0xf]
      %v1107 = vld [vmem:[#allocation8 + $0x38] sm:$0xf]
      %v1108 = vld [vmem:[#allocation8 + $0x3c] sm:$0xf]
      %v1109 = vld [vmem:[#allocation8 + $0x40] sm:$0xf]
      %v1110 = vld [vmem:[#allocation8 + $0x44] sm:$0xf]
      %v1111 = vld [vmem:[#allocation8 + $0x48] sm:$0xf]
      %v1112 = vld [vmem:[#allocation8 + $0x4c] sm:$0xf]
      %v1113 = vld [vmem:[#allocation8 + $0x50] sm:$0xf]
      %v1114 = vld [vmem:[#allocation8 + $0x54] sm:$0xf]
      %v1115 = vld [vmem:[#allocation8 + $0x58] sm:$0xf]
      %v1116 = vld [vmem:[#allocation8 + $0x5c] sm:$0xf]
      %v1117 = vld [vmem:[#allocation8 + $0x60] sm:$0xf]
      %v1118 = vld [vmem:[#allocation8 + $0x64] sm:$0xf]
      %v1119 = vld [vmem:[#allocation8 + $0x68] sm:$0xf]
      %v1120 = vld [vmem:[#allocation8 + $0x6c] sm:$0xf]
      %v1121 = vld [vmem:[#allocation8 + $0x70] sm:$0xf]
      %v1122 = vld [vmem:[#allocation8 + $0x74] sm:$0xf]
      %v1123 = vld [vmem:[#allocation8 + $0x78] sm:$0xf]
      %v1124 = vld [vmem:[#allocation8 + $0x7c] sm:$0xf]
      %v1125 = vld [vmem:[%s5] sm:$0x1]
      %v1127 = vlaneseq
      %v1128 = vshrl.u32 %v1127, 7
      %v1129 = vsub.s32 0, %v1128
      %v1130 = vrot.slane %v1125, %v1129
      %v1164 = vunpack.c.l.b16 %v1093
      %v1165 = vunpack.c.l.b16 %v1094
      %v1166 = vunpack.c.l.b16 %v1095
      %v1167 = vunpack.c.l.b16 %v1096
      %v1168 = vunpack.c.l.b16 %v1097
      %v1169 = vunpack.c.l.b16 %v1098
      %v1170 = vunpack.c.l.b16 %v1099
      %v1171 = vunpack.c.l.b16 %v1100
      %v1172 = vunpack.c.l.b16 %v1101
      %v1173 = vunpack.c.l.b16 %v1102
      %v1174 = vunpack.c.l.b16 %v1103
      %v1175 = vunpack.c.l.b16 %v1104
      %v1176 = vunpack.c.l.b16 %v1105
      %v1177 = vunpack.c.l.b16 %v1106
      %v1178 = vunpack.c.l.b16 %v1107
      %v1179 = vunpack.c.l.b16 %v1108
      %v1180 = vunpack.c.l.b16 %v1109
      %v1181 = vunpack.c.l.b16 %v1110
      %v1182 = vunpack.c.l.b16 %v1111
      %v1183 = vunpack.c.l.b16 %v1112
      %v1184 = vunpack.c.l.b16 %v1113
      %v1185 = vunpack.c.l.b16 %v1114
      %v1186 = vunpack.c.l.b16 %v1115
      %v1187 = vunpack.c.l.b16 %v1116
      %v1188 = vunpack.c.l.b16 %v1117
      %v1189 = vunpack.c.l.b16 %v1118
      %v1190 = vunpack.c.l.b16 %v1119
      %v1191 = vunpack.c.l.b16 %v1120
      %v1192 = vunpack.c.l.b16 %v1121
      %v1193 = vunpack.c.l.b16 %v1122
      %v1194 = vunpack.c.l.b16 %v1123
      %v1195 = vunpack.c.l.b16 %v1124
      %v1196 = vpack.c.b16 %v1165, %v1164
      %v1197 = vpack.c.b16 %v1167, %v1166
      %v1198 = vpack.c.b16 %v1169, %v1168
      %v1199 = vpack.c.b16 %v1171, %v1170
      %v1200 = vpack.c.b16 %v1173, %v1172
      %v1201 = vpack.c.b16 %v1175, %v1174
      %v1202 = vpack.c.b16 %v1177, %v1176
      %v1203 = vpack.c.b16 %v1179, %v1178
      %v1204 = vpack.c.b16 %v1181, %v1180
      %v1205 = vpack.c.b16 %v1183, %v1182
      %v1206 = vpack.c.b16 %v1185, %v1184
      %v1207 = vpack.c.b16 %v1187, %v1186
      %v1208 = vpack.c.b16 %v1189, %v1188
      %v1209 = vpack.c.b16 %v1191, %v1190
      %v1210 = vpack.c.b16 %v1193, %v1192
      %v1211 = vpack.c.b16 %v1195, %v1194
      %1228 = vmatprep.subr.bf16.mxu0 0
      %1229 = vmatpush1.bf16.msra.mxu0 %v1196
      %1230 = vmatprep.subr.bf16.mxu0 0
      %1231 = vmatpush1.bf16.msra.mxu0 %v1197
      %1232 = vmatprep.subr.bf16.mxu0 0
      %1233 = vmatpush1.bf16.msra.mxu0 %v1198
      %1234 = vmatprep.subr.bf16.mxu0 0
      %1235 = vmatpush1.bf16.msra.mxu0 %v1199
      %1236 = vmatprep.subr.bf16.mxu0 0
      %1237 = vmatpush1.bf16.msra.mxu0 %v1200
      %1238 = vmatprep.subr.bf16.mxu0 0
      %1239 = vmatpush1.bf16.msra.mxu0 %v1201
      %1240 = vmatprep.subr.bf16.mxu0 0
      %1241 = vmatpush1.bf16.msra.mxu0 %v1202
      %1242 = vmatprep.subr.bf16.mxu0 0
      %1243 = vmatpush1.bf16.msra.mxu0 %v1203
      %1244 = vmatprep.subr.bf16.mxu0 0
      %1245 = vmatpush1.bf16.msra.mxu0 %v1204
      %1246 = vmatprep.subr.bf16.mxu0 0
      %1247 = vmatpush1.bf16.msra.mxu0 %v1205
      %1248 = vmatprep.subr.bf16.mxu0 0
      %1249 = vmatpush1.bf16.msra.mxu0 %v1206
      %1250 = vmatprep.subr.bf16.mxu0 0
      %1251 = vmatpush1.bf16.msra.mxu0 %v1207
      %1252 = vmatprep.subr.bf16.mxu0 0
      %1253 = vmatpush1.bf16.msra.mxu0 %v1208
      %1254 = vmatprep.subr.bf16.mxu0 0
      %1255 = vmatpush1.bf16.msra.mxu0 %v1209
      %1256 = vmatprep.subr.bf16.mxu0 0
      %1257 = vmatpush1.bf16.msra.mxu0 %v1210
      %1258 = vmatprep.subr.bf16.mxu0 0
      %1259 = vmatpush1.bf16.msra.mxu0 %v1211
      %1260 = vmatprep.mubr.bf16.mxu0 %v1061
      %1261 = vmatmul.mubr.bf16.gmra.mrb[0].mxu0 %v949
      %v1262 = vpop.f32.mrb[0].mxu0
      %v1263 = vadd.f32 %v1130, %v1262
      %v1264 = vpop.f32.mrb[0].mxu0
      %v1265 = vpop.f32.mrb[0].mxu0
      %v1266 = vadd.f32 %v1130, %v1265
      %v1267 = vpop.f32.mrb[0].mxu0
      %1268 = vmatprep.mubr.bf16.mxu0 %v1062
      %1269 = vmatmul.mubr.bf16.gmra.mrb[0].mxu0 %v950
      %v1270 = vpop.f32.mrb[0].mxu0
      %v1271 = vadd.f32 %v1130, %v1270
      %v1272 = vpop.f32.mrb[0].mxu0
      %v1273 = vpop.f32.mrb[0].mxu0
      %v1274 = vadd.f32 %v1130, %v1273
      %v1275 = vpop.f32.mrb[0].mxu0
      %1276 = vmatprep.mubr.bf16.mxu0 %v1063
      %1277 = vmatmul.mubr.bf16.gmra.mrb[0].mxu0 %v951
      %v1278 = vpop.f32.mrb[0].mxu0
      %v1279 = vadd.f32 %v1130, %v1278
      %v1280 = vpop.f32.mrb[0].mxu0
      %v1281 = vpop.f32.mrb[0].mxu0
      %v1282 = vadd.f32 %v1130, %v1281
      %v1283 = vpop.f32.mrb[0].mxu0
      %1284 = vmatprep.mubr.bf16.mxu0 %v1064
      %1285 = vmatmul.mubr.bf16.gmra.mrb[0].mxu0 %v952
      %v1286 = vpop.f32.mrb[0].mxu0
      %v1287 = vadd.f32 %v1130, %v1286
      %v1288 = vpop.f32.mrb[0].mxu0
      %v1289 = vpop.f32.mrb[0].mxu0
      %v1290 = vadd.f32 %v1130, %v1289
      %v1291 = vpop.f32.mrb[0].mxu0
      %1292 = vmatprep.mubr.bf16.mxu0 %v1065
      %1293 = vmatmul.mubr.bf16.gmra.mrb[0].mxu0 %v953
      %v1294 = vpop.f32.mrb[0].mxu0
      %v1295 = vadd.f32 %v1130, %v1294
      %v1296 = vpop.f32.mrb[0].mxu0
      %v1297 = vpop.f32.mrb[0].mxu0
      %v1298 = vadd.f32 %v1130, %v1297
      %v1299 = vpop.f32.mrb[0].mxu0
      %1300 = vmatprep.mubr.bf16.mxu0 %v1066
      %1301 = vmatmul.mubr.bf16.gmra.mrb[0].mxu0 %v954
      %v1302 = vpop.f32.mrb[0].mxu0
      %v1303 = vadd.f32 %v1130, %v1302
      %v1304 = vpop.f32.mrb[0].mxu0
      %v1305 = vpop.f32.mrb[0].mxu0
      %v1306 = vadd.f32 %v1130, %v1305
      %v1307 = vpop.f32.mrb[0].mxu0
      %1308 = vmatprep.mubr.bf16.mxu0 %v1067
      %1309 = vmatmul.mubr.bf16.gmra.mrb[0].mxu0 %v955
      %v1310 = vpop.f32.mrb[0].mxu0
      %v1311 = vadd.f32 %v1130, %v1310
      %v1312 = vpop.f32.mrb[0].mxu0
      %v1313 = vpop.f32.mrb[0].mxu0
      %v1314 = vadd.f32 %v1130, %v1313
      %v1315 = vpop.f32.mrb[0].mxu0
      %1316 = vmatprep.mubr.bf16.mxu0 %v1068
      %1317 = vmatmul.mubr.bf16.gmra.mrb[0].mxu0 %v956
      %v1318 = vpop.f32.mrb[0].mxu0
      %v1319 = vadd.f32 %v1130, %v1318
      %v1320 = vpop.f32.mrb[0].mxu0
      %v1321 = vpop.f32.mrb[0].mxu0
      %v1322 = vadd.f32 %v1130, %v1321
      %v1323 = vpop.f32.mrb[0].mxu0
      %1324 = vmatprep.mubr.bf16.mxu0 %v1069
      %1325 = vmatmul.mubr.bf16.gmra.mrb[0].mxu0 %v957
      %v1326 = vpop.f32.mrb[0].mxu0
      %v1327 = vadd.f32 %v1130, %v1326
      %v1328 = vpop.f32.mrb[0].mxu0
      %v1329 = vpop.f32.mrb[0].mxu0
      %v1330 = vadd.f32 %v1130, %v1329
      %v1331 = vpop.f32.mrb[0].mxu0
      %1332 = vmatprep.mubr.bf16.mxu0 %v1070
      %1333 = vmatmul.mubr.bf16.gmra.mrb[0].mxu0 %v958
      %v1334 = vpop.f32.mrb[0].mxu0
      %v1335 = vadd.f32 %v1130, %v1334
      %v1336 = vpop.f32.mrb[0].mxu0
      %v1337 = vpop.f32.mrb[0].mxu0
      %v1338 = vadd.f32 %v1130, %v1337
      %v1339 = vpop.f32.mrb[0].mxu0
      %1340 = vmatprep.mubr.bf16.mxu0 %v1071
      %1341 = vmatmul.mubr.bf16.gmra.mrb[0].mxu0 %v959
      %v1342 = vpop.f32.mrb[0].mxu0
      %v1343 = vadd.f32 %v1130, %v1342
      %v1344 = vpop.f32.mrb[0].mxu0
      %v1345 = vpop.f32.mrb[0].mxu0
      %v1346 = vadd.f32 %v1130, %v1345
      %v1347 = vpop.f32.mrb[0].mxu0
      %1348 = vmatprep.mubr.bf16.mxu0 %v1072
      %1349 = vmatmul.mubr.bf16.gmra.mrb[0].mxu0 %v960
      %v1350 = vpop.f32.mrb[0].mxu0
      %v1351 = vadd.f32 %v1130, %v1350
      %v1352 = vpop.f32.mrb[0].mxu0
      %v1353 = vpop.f32.mrb[0].mxu0
      %v1354 = vadd.f32 %v1130, %v1353
      %v1355 = vpop.f32.mrb[0].mxu0
      %1356 = vmatprep.mubr.bf16.mxu0 %v1073
      %1357 = vmatmul.mubr.bf16.gmra.mrb[0].mxu0 %v961
      %v1358 = vpop.f32.mrb[0].mxu0
      %v1359 = vadd.f32 %v1130, %v1358
      %v1360 = vpop.f32.mrb[0].mxu0
      %v1361 = vpop.f32.mrb[0].mxu0
      %v1362 = vadd.f32 %v1130, %v1361
      %v1363 = vpop.f32.mrb[0].mxu0
      %1364 = vmatprep.mubr.bf16.mxu0 %v1074
      %1365 = vmatmul.mubr.bf16.gmra.mrb[0].mxu0 %v962
      %v1366 = vpop.f32.mrb[0].mxu0
      %v1367 = vadd.f32 %v1130, %v1366
      %v1368 = vpop.f32.mrb[0].mxu0
      %v1369 = vpop.f32.mrb[0].mxu0
      %v1370 = vadd.f32 %v1130, %v1369
      %v1371 = vpop.f32.mrb[0].mxu0
      %1372 = vmatprep.mubr.bf16.mxu0 %v1075
      %1373 = vmatmul.mubr.bf16.gmra.mrb[0].mxu0 %v963
      %v1374 = vpop.f32.mrb[0].mxu0
      %v1375 = vadd.f32 %v1130, %v1374
      %v1376 = vpop.f32.mrb[0].mxu0
      %v1377 = vpop.f32.mrb[0].mxu0
      %v1378 = vadd.f32 %v1130, %v1377
      %v1379 = vpop.f32.mrb[0].mxu0
      %1380 = vmatprep.mubr.bf16.mxu0 %v1076
      %1381 = vmatmul.mubr.bf16.gmra.mrb[0].mxu0 %v964
      %v1382 = vpop.f32.mrb[0].mxu0
      %v1383 = vadd.f32 %v1130, %v1382
      %v1384 = vpop.f32.mrb[0].mxu0
      %v1385 = vpop.f32.mrb[0].mxu0
      %v1386 = vadd.f32 %v1130, %v1385
      %v1387 = vpop.f32.mrb[0].mxu0
      %1388 = vdwg.mxu0
      %v1389 = vmax.f32 %v1263, 0.0
      %v1390 = vmax.f32 %v1266, 0.0
      %v1391 = vmax.f32 %v1271, 0.0
      %v1392 = vmax.f32 %v1274, 0.0
      %v1393 = vmax.f32 %v1279, 0.0
      %v1394 = vmax.f32 %v1282, 0.0
      %v1395 = vmax.f32 %v1287, 0.0
      %v1396 = vmax.f32 %v1290, 0.0
      %v1397 = vmax.f32 %v1295, 0.0
      %v1398 = vmax.f32 %v1298, 0.0
      %v1399 = vmax.f32 %v1303, 0.0
      %v1400 = vmax.f32 %v1306, 0.0
      %v1401 = vmax.f32 %v1311, 0.0
      %v1402 = vmax.f32 %v1314, 0.0
      %v1403 = vmax.f32 %v1319, 0.0
      %v1404 = vmax.f32 %v1322, 0.0
      %v1405 = vmax.f32 %v1327, 0.0
      %v1406 = vmax.f32 %v1330, 0.0
      %v1407 = vmax.f32 %v1335, 0.0
      %v1408 = vmax.f32 %v1338, 0.0
      %v1409 = vmax.f32 %v1343, 0.0
      %v1410 = vmax.f32 %v1346, 0.0
      %v1411 = vmax.f32 %v1351, 0.0
      %v1412 = vmax.f32 %v1354, 0.0
      %v1413 = vmax.f32 %v1359, 0.0
      %v1414 = vmax.f32 %v1362, 0.0
      %v1415 = vmax.f32 %v1367, 0.0
      %v1416 = vmax.f32 %v1370, 0.0
      %v1417 = vmax.f32 %v1375, 0.0
      %v1418 = vmax.f32 %v1378, 0.0
      %v1419 = vmax.f32 %v1383, 0.0
      %v1420 = vmax.f32 %v1386, 0.0
      %1421 = vadd.xlane.f32.xlu0 %v1389
      %v1422 = vpop.xlane.xlu0 %1421
      %1423 = vadd.xlane.f32.xlu0 %v1390
      %v1424 = vpop.xlane.xlu0 %1423
      %1425 = vadd.xlane.f32.xlu0 %v1391
      %v1426 = vpop.xlane.xlu0 %1425
      %1427 = vadd.xlane.f32.xlu0 %v1392
      %v1428 = vpop.xlane.xlu0 %1427
      %1429 = vadd.xlane.f32.xlu0 %v1393
      %v1430 = vpop.xlane.xlu0 %1429
      %1431 = vadd.xlane.f32.xlu0 %v1394
      %v1432 = vpop.xlane.xlu0 %1431
      %1433 = vadd.xlane.f32.xlu0 %v1395
      %v1434 = vpop.xlane.xlu0 %1433
      %1435 = vadd.xlane.f32.xlu0 %v1396
      %v1436 = vpop.xlane.xlu0 %1435
      %1437 = vadd.xlane.f32.xlu0 %v1397
      %v1438 = vpop.xlane.xlu0 %1437
      %1439 = vadd.xlane.f32.xlu0 %v1398
      %v1440 = vpop.xlane.xlu0 %1439
      %1441 = vadd.xlane.f32.xlu0 %v1399
      %v1442 = vpop.xlane.xlu0 %1441
      %1443 = vadd.xlane.f32.xlu0 %v1400
      %v1444 = vpop.xlane.xlu0 %1443
      %1445 = vadd.xlane.f32.xlu0 %v1401
      %v1446 = vpop.xlane.xlu0 %1445
      %1447 = vadd.xlane.f32.xlu0 %v1402
      %v1448 = vpop.xlane.xlu0 %1447
      %1449 = vadd.xlane.f32.xlu0 %v1403
      %v1450 = vpop.xlane.xlu0 %1449
      %1451 = vadd.xlane.f32.xlu0 %v1404
      %v1452 = vpop.xlane.xlu0 %1451
      %1453 = vadd.xlane.f32.xlu0 %v1405
      %v1454 = vpop.xlane.xlu0 %1453
      %1455 = vadd.xlane.f32.xlu0 %v1406
      %v1456 = vpop.xlane.xlu0 %1455
      %1457 = vadd.xlane.f32.xlu0 %v1407
      %v1458 = vpop.xlane.xlu0 %1457
      %1459 = vadd.xlane.f32.xlu0 %v1408
      %v1460 = vpop.xlane.xlu0 %1459
      %1461 = vadd.xlane.f32.xlu0 %v1409
      %v1462 = vpop.xlane.xlu0 %1461
      %1463 = vadd.xlane.f32.xlu0 %v1410
      %v1464 = vpop.xlane.xlu0 %1463
      %1465 = vadd.xlane.f32.xlu0 %v1411
      %v1466 = vpop.xlane.xlu0 %1465
      %1467 = vadd.xlane.f32.xlu0 %v1412
      %v1468 = vpop.xlane.xlu0 %1467
      %1469 = vadd.xlane.f32.xlu0 %v1413
      %v1470 = vpop.xlane.xlu0 %1469
      %1471 = vadd.xlane.f32.xlu0 %v1414
      %v1472 = vpop.xlane.xlu0 %1471
      %1473 = vadd.xlane.f32.xlu0 %v1415
      %v1474 = vpop.xlane.xlu0 %1473
      %1475 = vadd.xlane.f32.xlu0 %v1416
      %v1476 = vpop.xlane.xlu0 %1475
      %1477 = vadd.xlane.f32.xlu0 %v1417
      %v1478 = vpop.xlane.xlu0 %1477
      %1479 = vadd.xlane.f32.xlu0 %v1418
      %v1480 = vpop.xlane.xlu0 %1479
      %1481 = vadd.xlane.f32.xlu0 %v1419
      %v1482 = vpop.xlane.xlu0 %1481
      %1483 = vadd.xlane.f32.xlu0 %v1420
      %v1484 = vpop.xlane.xlu0 %1483
      %v1485 = vmul.f32 %v1422, 0.0078125
      %v1486 = vmul.f32 %v1424, 0.0078125
      %v1487 = vmul.f32 %v1426, 0.0078125
      %v1488 = vmul.f32 %v1428, 0.0078125
      %v1489 = vmul.f32 %v1430, 0.0078125
      %v1490 = vmul.f32 %v1432, 0.0078125
      %v1491 = vmul.f32 %v1434, 0.0078125
      %v1492 = vmul.f32 %v1436, 0.0078125
      %v1493 = vmul.f32 %v1438, 0.0078125
      %v1494 = vmul.f32 %v1440, 0.0078125
      %v1495 = vmul.f32 %v1442, 0.0078125
      %v1496 = vmul.f32 %v1444, 0.0078125
      %v1497 = vmul.f32 %v1446, 0.0078125
      %v1498 = vmul.f32 %v1448, 0.0078125
      %v1499 = vmul.f32 %v1450, 0.0078125
      %v1500 = vmul.f32 %v1452, 0.0078125
      %v1501 = vmul.f32 %v1454, 0.0078125
      %v1502 = vmul.f32 %v1456, 0.0078125
      %v1503 = vmul.f32 %v1458, 0.0078125
      %v1504 = vmul.f32 %v1460, 0.0078125
      %v1505 = vmul.f32 %v1462, 0.0078125
      %v1506 = vmul.f32 %v1464, 0.0078125
      %v1507 = vmul.f32 %v1466, 0.0078125
      %v1508 = vmul.f32 %v1468, 0.0078125
      %v1509 = vmul.f32 %v1470, 0.0078125
      %v1510 = vmul.f32 %v1472, 0.0078125
      %v1511 = vmul.f32 %v1474, 0.0078125
      %v1512 = vmul.f32 %v1476, 0.0078125
      %v1513 = vmul.f32 %v1478, 0.0078125
      %v1514 = vmul.f32 %v1480, 0.0078125
      %v1515 = vmul.f32 %v1482, 0.0078125
      %v1516 = vmul.f32 %v1484, 0.0078125
      %v1517 = vsub.f32 %v1389, %v1485
      %v1518 = vsub.f32 %v1390, %v1486
      %v1519 = vsub.f32 %v1391, %v1487
      %v1520 = vsub.f32 %v1392, %v1488
      %v1521 = vsub.f32 %v1393, %v1489
      %v1522 = vsub.f32 %v1394, %v1490
      %v1523 = vsub.f32 %v1395, %v1491
      %v1524 = vsub.f32 %v1396, %v1492
      %v1525 = vsub.f32 %v1397, %v1493
      %v1526 = vsub.f32 %v1398, %v1494
      %v1527 = vsub.f32 %v1399, %v1495
      %v1528 = vsub.f32 %v1400, %v1496
      %v1529 = vsub.f32 %v1401, %v1497
      %v1530 = vsub.f32 %v1402, %v1498
      %v1531 = vsub.f32 %v1403, %v1499
      %v1532 = vsub.f32 %v1404, %v1500
      %v1533 = vsub.f32 %v1405, %v1501
      %v1534 = vsub.f32 %v1406, %v1502
      %v1535 = vsub.f32 %v1407, %v1503
      %v1536 = vsub.f32 %v1408, %v1504
      %v1537 = vsub.f32 %v1409, %v1505
      %v1538 = vsub.f32 %v1410, %v1506
      %v1539 = vsub.f32 %v1411, %v1507
      %v1540 = vsub.f32 %v1412, %v1508
      %v1541 = vsub.f32 %v1413, %v1509
      %v1542 = vsub.f32 %v1414, %v1510
      %v1543 = vsub.f32 %v1415, %v1511
      %v1544 = vsub.f32 %v1416, %v1512
      %v1545 = vsub.f32 %v1417, %v1513
      %v1546 = vsub.f32 %v1418, %v1514
      %v1547 = vsub.f32 %v1419, %v1515
      %v1548 = vsub.f32 %v1420, %v1516
      %v1549 = vmul.f32 %v1517, %v1517
      %v1550 = vmul.f32 %v1518, %v1518
      %v1551 = vmul.f32 %v1519, %v1519
      %v1552 = vmul.f32 %v1520, %v1520
      %v1553 = vmul.f32 %v1521, %v1521
      %v1554 = vmul.f32 %v1522, %v1522
      %v1555 = vmul.f32 %v1523, %v1523
      %v1556 = vmul.f32 %v1524, %v1524
      %v1557 = vmul.f32 %v1525, %v1525
      %v1558 = vmul.f32 %v1526, %v1526
      %v1559 = vmul.f32 %v1527, %v1527
      %v1560 = vmul.f32 %v1528, %v1528
      %v1561 = vmul.f32 %v1529, %v1529
      %v1562 = vmul.f32 %v1530, %v1530
      %v1563 = vmul.f32 %v1531, %v1531
      %v1564 = vmul.f32 %v1532, %v1532
      %v1565 = vmul.f32 %v1533, %v1533
      %v1566 = vmul.f32 %v1534, %v1534
      %v1567 = vmul.f32 %v1535, %v1535
      %v1568 = vmul.f32 %v1536, %v1536
      %v1569 = vmul.f32 %v1537, %v1537
      %v1570 = vmul.f32 %v1538, %v1538
      %v1571 = vmul.f32 %v1539, %v1539
      %v1572 = vmul.f32 %v1540, %v1540
      %v1573 = vmul.f32 %v1541, %v1541
      %v1574 = vmul.f32 %v1542, %v1542
      %v1575 = vmul.f32 %v1543, %v1543
      %v1576 = vmul.f32 %v1544, %v1544
      %v1577 = vmul.f32 %v1545, %v1545
      %v1578 = vmul.f32 %v1546, %v1546
      %v1579 = vmul.f32 %v1547, %v1547
      %v1580 = vmul.f32 %v1548, %v1548
      %1581 = vadd.xlane.f32.xlu0 %v1549
      %v1582 = vpop.xlane.xlu0 %1581
      %1583 = vadd.xlane.f32.xlu0 %v1550
      %v1584 = vpop.xlane.xlu0 %1583
      %1585 = vadd.xlane.f32.xlu0 %v1551
      %v1586 = vpop.xlane.xlu0 %1585
      %1587 = vadd.xlane.f32.xlu0 %v1552
      %v1588 = vpop.xlane.xlu0 %1587
      %1589 = vadd.xlane.f32.xlu0 %v1553
      %v1590 = vpop.xlane.xlu0 %1589
      %1591 = vadd.xlane.f32.xlu0 %v1554
      %v1592 = vpop.xlane.xlu0 %1591
      %1593 = vadd.xlane.f32.xlu0 %v1555
      %v1594 = vpop.xlane.xlu0 %1593
      %1595 = vadd.xlane.f32.xlu0 %v1556
      %v1596 = vpop.xlane.xlu0 %1595
      %1597 = vadd.xlane.f32.xlu0 %v1557
      %v1598 = vpop.xlane.xlu0 %1597
      %1599 = vadd.xlane.f32.xlu0 %v1558
      %v1600 = vpop.xlane.xlu0 %1599
      %1601 = vadd.xlane.f32.xlu0 %v1559
      %v1602 = vpop.xlane.xlu0 %1601
      %1603 = vadd.xlane.f32.xlu0 %v1560
      %v1604 = vpop.xlane.xlu0 %1603
      %1605 = vadd.xlane.f32.xlu0 %v1561
      %v1606 = vpop.xlane.xlu0 %1605
      %1607 = vadd.xlane.f32.xlu0 %v1562
      %v1608 = vpop.xlane.xlu0 %1607
      %1609 = vadd.xlane.f32.xlu0 %v1563
      %v1610 = vpop.xlane.xlu0 %1609
      %1611 = vadd.xlane.f32.xlu0 %v1564
      %v1612 = vpop.xlane.xlu0 %1611
      %1613 = vadd.xlane.f32.xlu0 %v1565
      %v1614 = vpop.xlane.xlu0 %1613
      %1615 = vadd.xlane.f32.xlu0 %v1566
      %v1616 = vpop.xlane.xlu0 %1615
      %1617 = vadd.xlane.f32.xlu0 %v1567
      %v1618 = vpop.xlane.xlu0 %1617
      %1619 = vadd.xlane.f32.xlu0 %v1568
      %v1620 = vpop.xlane.xlu0 %1619
      %1621 = vadd.xlane.f32.xlu0 %v1569
      %v1622 = vpop.xlane.xlu0 %1621
      %1623 = vadd.xlane.f32.xlu0 %v1570
      %v1624 = vpop.xlane.xlu0 %1623
      %1625 = vadd.xlane.f32.xlu0 %v1571
      %v1626 = vpop.xlane.xlu0 %1625
      %1627 = vadd.xlane.f32.xlu0 %v1572
      %v1628 = vpop.xlane.xlu0 %1627
      %1629 = vadd.xlane.f32.xlu0 %v1573
      %v1630 = vpop.xlane.xlu0 %1629
      %1631 = vadd.xlane.f32.xlu0 %v1574
      %v1632 = vpop.xlane.xlu0 %1631
      %1633 = vadd.xlane.f32.xlu0 %v1575
      %v1634 = vpop.xlane.xlu0 %1633
      %1635 = vadd.xlane.f32.xlu0 %v1576
      %v1636 = vpop.xlane.xlu0 %1635
      %1637 = vadd.xlane.f32.xlu0 %v1577
      %v1638 = vpop.xlane.xlu0 %1637
      %1639 = vadd.xlane.f32.xlu0 %v1578
      %v1640 = vpop.xlane.xlu0 %1639
      %1641 = vadd.xlane.f32.xlu0 %v1579
      %v1642 = vpop.xlane.xlu0 %1641
      %1643 = vadd.xlane.f32.xlu0 %v1580
      %v1644 = vpop.xlane.xlu0 %1643
      %v1645 = vmul.f32 %v1582, 0.0078125
      %v1646 = vmul.f32 %v1584, 0.0078125
      %v1647 = vmul.f32 %v1586, 0.0078125
      %v1648 = vmul.f32 %v1588, 0.0078125
      %v1649 = vmul.f32 %v1590, 0.0078125
      %v1650 = vmul.f32 %v1592, 0.0078125
      %v1651 = vmul.f32 %v1594, 0.0078125
      %v1652 = vmul.f32 %v1596, 0.0078125
      %v1653 = vmul.f32 %v1598, 0.0078125
      %v1654 = vmul.f32 %v1600, 0.0078125
      %v1655 = vmul.f32 %v1602, 0.0078125
      %v1656 = vmul.f32 %v1604, 0.0078125
      %v1657 = vmul.f32 %v1606, 0.0078125
      %v1658 = vmul.f32 %v1608, 0.0078125
      %v1659 = vmul.f32 %v1610, 0.0078125
      %v1660 = vmul.f32 %v1612, 0.0078125
      %v1661 = vmul.f32 %v1614, 0.0078125
      %v1662 = vmul.f32 %v1616, 0.0078125
      %v1663 = vmul.f32 %v1618, 0.0078125
      %v1664 = vmul.f32 %v1620, 0.0078125
      %v1665 = vmul.f32 %v1622, 0.0078125
      %v1666 = vmul.f32 %v1624, 0.0078125
      %v1667 = vmul.f32 %v1626, 0.0078125
      %v1668 = vmul.f32 %v1628, 0.0078125
      %v1669 = vmul.f32 %v1630, 0.0078125
      %v1670 = vmul.f32 %v1632, 0.0078125
      %v1671 = vmul.f32 %v1634, 0.0078125
      %v1672 = vmul.f32 %v1636, 0.0078125
      %v1673 = vmul.f32 %v1638, 0.0078125
      %v1674 = vmul.f32 %v1640, 0.0078125
      %v1675 = vmul.f32 %v1642, 0.0078125
      %v1676 = vmul.f32 %v1644, 0.0078125
      %v1677 = vadd.f32 %v1645, 1e-05
      %v1678 = vadd.f32 %v1646, 1e-05
      %v1679 = vadd.f32 %v1647, 1e-05
      %v1680 = vadd.f32 %v1648, 1e-05
      %v1681 = vadd.f32 %v1649, 1e-05
      %v1682 = vadd.f32 %v1650, 1e-05
      %v1683 = vadd.f32 %v1651, 1e-05
      %v1684 = vadd.f32 %v1652, 1e-05
      %v1685 = vadd.f32 %v1653, 1e-05
      %v1686 = vadd.f32 %v1654, 1e-05
      %v1687 = vadd.f32 %v1655, 1e-05
      %v1688 = vadd.f32 %v1656, 1e-05
      %v1689 = vadd.f32 %v1657, 1e-05
      %v1690 = vadd.f32 %v1658, 1e-05
      %v1691 = vadd.f32 %v1659, 1e-05
      %v1692 = vadd.f32 %v1660, 1e-05
      %v1693 = vadd.f32 %v1661, 1e-05
      %v1694 = vadd.f32 %v1662, 1e-05
      %v1695 = vadd.f32 %v1663, 1e-05
      %v1696 = vadd.f32 %v1664, 1e-05
      %v1697 = vadd.f32 %v1665, 1e-05
      %v1698 = vadd.f32 %v1666, 1e-05
      %v1699 = vadd.f32 %v1667, 1e-05
      %v1700 = vadd.f32 %v1668, 1e-05
      %v1701 = vadd.f32 %v1669, 1e-05
      %v1702 = vadd.f32 %v1670, 1e-05
      %v1703 = vadd.f32 %v1671, 1e-05
      %v1704 = vadd.f32 %v1672, 1e-05
      %v1705 = vadd.f32 %v1673, 1e-05
      %v1706 = vadd.f32 %v1674, 1e-05
      %v1707 = vadd.f32 %v1675, 1e-05
      %v1708 = vadd.f32 %v1676, 1e-05
      %v1709 = vrsqrt.pop %v1677
      %v1710 = vrsqrt.pop %v1678
      %v1711 = vrsqrt.pop %v1679
      %v1712 = vrsqrt.pop %v1680
      %v1713 = vrsqrt.pop %v1681
      %v1714 = vrsqrt.pop %v1682
      %v1715 = vrsqrt.pop %v1683
      %v1716 = vrsqrt.pop %v1684
      %v1717 = vrsqrt.pop %v1685
      %v1718 = vrsqrt.pop %v1686
      %v1719 = vrsqrt.pop %v1687
      %v1720 = vrsqrt.pop %v1688
      %v1721 = vrsqrt.pop %v1689
      %v1722 = vrsqrt.pop %v1690
      %v1723 = vrsqrt.pop %v1691
      %v1724 = vrsqrt.pop %v1692
      %v1725 = vrsqrt.pop %v1693
      %v1726 = vrsqrt.pop %v1694
      %v1727 = vrsqrt.pop %v1695
      %v1728 = vrsqrt.pop %v1696
      %v1729 = vrsqrt.pop %v1697
      %v1730 = vrsqrt.pop %v1698
      %v1731 = vrsqrt.pop %v1699
      %v1732 = vrsqrt.pop %v1700
      %v1733 = vrsqrt.pop %v1701
      %v1734 = vrsqrt.pop %v1702
      %v1735 = vrsqrt.pop %v1703
      %v1736 = vrsqrt.pop %v1704
      %v1737 = vrsqrt.pop %v1705
      %v1738 = vrsqrt.pop %v1706
      %v1739 = vrsqrt.pop %v1707
      %v1740 = vrsqrt.pop %v1708
      %v1741 = vmul.f32 %v1517, %v1709
      %v1742 = vmul.f32 %v1518, %v1710
      %v1743 = vmul.f32 %v1519, %v1711
      %v1744 = vmul.f32 %v1520, %v1712
      %v1745 = vmul.f32 %v1521, %v1713
      %v1746 = vmul.f32 %v1522, %v1714
      %v1747 = vmul.f32 %v1523, %v1715
      %v1748 = vmul.f32 %v1524, %v1716
      %v1749 = vmul.f32 %v1525, %v1717
      %v1750 = vmul.f32 %v1526, %v1718
      %v1751 = vmul.f32 %v1527, %v1719
      %v1752 = vmul.f32 %v1528, %v1720
      %v1753 = vmul.f32 %v1529, %v1721
      %v1754 = vmul.f32 %v1530, %v1722
      %v1755 = vmul.f32 %v1531, %v1723
      %v1756 = vmul.f32 %v1532, %v1724
      %v1757 = vmul.f32 %v1533, %v1725
      %v1758 = vmul.f32 %v1534, %v1726
      %v1759 = vmul.f32 %v1535, %v1727
      %v1760 = vmul.f32 %v1536, %v1728
      %v1761 = vmul.f32 %v1537, %v1729
      %v1762 = vmul.f32 %v1538, %v1730
      %v1763 = vmul.f32 %v1539, %v1731
      %v1764 = vmul.f32 %v1540, %v1732
      %v1765 = vmul.f32 %v1541, %v1733
      %v1766 = vmul.f32 %v1542, %v1734
      %v1767 = vmul.f32 %v1543, %v1735
      %v1768 = vmul.f32 %v1544, %v1736
      %v1769 = vmul.f32 %v1545, %v1737
      %v1770 = vmul.f32 %v1546, %v1738
      %v1771 = vmul.f32 %v1547, %v1739
      %v1772 = vmul.f32 %v1548, %v1740
      %v1773 = vld [vmem:[%s6] sm:$0x1]
      %v1775 = vlaneseq
      %v1776 = vshrl.u32 %v1775, 7
      %v1777 = vsub.s32 0, %v1776
      %v1778 = vrot.slane %v1773, %v1777
      %v1780 = vmul.f32 %v1741, %v1778
      %v1781 = vmul.f32 %v1742, %v1778
      %v1782 = vmul.f32 %v1743, %v1778
      %v1783 = vmul.f32 %v1744, %v1778
      %v1784 = vmul.f32 %v1745, %v1778
      %v1785 = vmul.f32 %v1746, %v1778
      %v1786 = vmul.f32 %v1747, %v1778
      %v1787 = vmul.f32 %v1748, %v1778
      %v1788 = vmul.f32 %v1749, %v1778
      %v1789 = vmul.f32 %v1750, %v1778
      %v1790 = vmul.f32 %v1751, %v1778
      %v1791 = vmul.f32 %v1752, %v1778
      %v1792 = vmul.f32 %v1753, %v1778
      %v1793 = vmul.f32 %v1754, %v1778
      %v1794 = vmul.f32 %v1755, %v1778
      %v1795 = vmul.f32 %v1756, %v1778
      %v1796 = vmul.f32 %v1757, %v1778
      %v1797 = vmul.f32 %v1758, %v1778
      %v1798 = vmul.f32 %v1759, %v1778
      %v1799 = vmul.f32 %v1760, %v1778
      %v1800 = vmul.f32 %v1761, %v1778
      %v1801 = vmul.f32 %v1762, %v1778
      %v1802 = vmul.f32 %v1763, %v1778
      %v1803 = vmul.f32 %v1764, %v1778
      %v1804 = vmul.f32 %v1765, %v1778
      %v1805 = vmul.f32 %v1766, %v1778
      %v1806 = vmul.f32 %v1767, %v1778
      %v1807 = vmul.f32 %v1768, %v1778
      %v1808 = vmul.f32 %v1769, %v1778
      %v1809 = vmul.f32 %v1770, %v1778
      %v1810 = vmul.f32 %v1771, %v1778
      %v1811 = vmul.f32 %v1772, %v1778
      %v1812 = vld [vmem:[%s7] sm:$0x1]
      %v1814 = vlaneseq
      %v1815 = vshrl.u32 %v1814, 7
      %v1816 = vsub.s32 0, %v1815
      %v1817 = vrot.slane %v1812, %v1816
      %v1819 = vadd.f32 %v1780, %v1817
      %v1820 = vadd.f32 %v1781, %v1817
      %v1821 = vadd.f32 %v1782, %v1817
      %v1822 = vadd.f32 %v1783, %v1817
      %v1823 = vadd.f32 %v1784, %v1817
      %v1824 = vadd.f32 %v1785, %v1817
      %v1825 = vadd.f32 %v1786, %v1817
      %v1826 = vadd.f32 %v1787, %v1817
      %v1827 = vadd.f32 %v1788, %v1817
      %v1828 = vadd.f32 %v1789, %v1817
      %v1829 = vadd.f32 %v1790, %v1817
      %v1830 = vadd.f32 %v1791, %v1817
      %v1831 = vadd.f32 %v1792, %v1817
      %v1832 = vadd.f32 %v1793, %v1817
      %v1833 = vadd.f32 %v1794, %v1817
      %v1834 = vadd.f32 %v1795, %v1817
      %v1835 = vadd.f32 %v1796, %v1817
      %v1836 = vadd.f32 %v1797, %v1817
      %v1837 = vadd.f32 %v1798, %v1817
      %v1838 = vadd.f32 %v1799, %v1817
      %v1839 = vadd.f32 %v1800, %v1817
      %v1840 = vadd.f32 %v1801, %v1817
      %v1841 = vadd.f32 %v1802, %v1817
      %v1842 = vadd.f32 %v1803, %v1817
      %v1843 = vadd.f32 %v1804, %v1817
      %v1844 = vadd.f32 %v1805, %v1817
      %v1845 = vadd.f32 %v1806, %v1817
      %v1846 = vadd.f32 %v1807, %v1817
      %v1847 = vadd.f32 %v1808, %v1817
      %v1848 = vadd.f32 %v1809, %v1817
      %v1849 = vadd.f32 %v1810, %v1817
      %v1850 = vadd.f32 %v1811, %v1817
      %1851 = vst [vmem:[#allocation9] sm:$0xff] %v1819
      %1852 = vst [vmem:[#allocation9 + $0x8] sm:$0xff] %v1820
      %1853 = vst [vmem:[#allocation9 + $0x10] sm:$0xff] %v1821
      %1854 = vst [vmem:[#allocation9 + $0x18] sm:$0xff] %v1822
      %1855 = vst [vmem:[#allocation9 + $0x20] sm:$0xff] %v1823
      %1856 = vst [vmem:[#allocation9 + $0x28] sm:$0xff] %v1824
      %1857 = vst [vmem:[#allocation9 + $0x30] sm:$0xff] %v1825
      %1858 = vst [vmem:[#allocation9 + $0x38] sm:$0xff] %v1826
      %1859 = vst [vmem:[#allocation9 + $0x40] sm:$0xff] %v1827
      %1860 = vst [vmem:[#allocation9 + $0x48] sm:$0xff] %v1828
      %1861 = vst [vmem:[#allocation9 + $0x50] sm:$0xff] %v1829
      %1862 = vst [vmem:[#allocation9 + $0x58] sm:$0xff] %v1830
      %1863 = vst [vmem:[#allocation9 + $0x60] sm:$0xff] %v1831
      %1864 = vst [vmem:[#allocation9 + $0x68] sm:$0xff] %v1832
      %1865 = vst [vmem:[#allocation9 + $0x70] sm:$0xff] %v1833
      %1866 = vst [vmem:[#allocation9 + $0x78] sm:$0xff] %v1834
      %1867 = vst [vmem:[#allocation9 + $0x80] sm:$0xff] %v1835
      %1868 = vst [vmem:[#allocation9 + $0x88] sm:$0xff] %v1836
      %1869 = vst [vmem:[#allocation9 + $0x90] sm:$0xff] %v1837
      %1870 = vst [vmem:[#allocation9 + $0x98] sm:$0xff] %v1838
      %1871 = vst [vmem:[#allocation9 + $0xa0] sm:$0xff] %v1839
      %1872 = vst [vmem:[#allocation9 + $0xa8] sm:$0xff] %v1840
      %1873 = vst [vmem:[#allocation9 + $0xb0] sm:$0xff] %v1841
      %1874 = vst [vmem:[#allocation9 + $0xb8] sm:$0xff] %v1842
      %1875 = vst [vmem:[#allocation9 + $0xc0] sm:$0xff] %v1843
      %1876 = vst [vmem:[#allocation9 + $0xc8] sm:$0xff] %v1844
      %1877 = vst [vmem:[#allocation9 + $0xd0] sm:$0xff] %v1845
      %1878 = vst [vmem:[#allocation9 + $0xd8] sm:$0xff] %v1846
      %1879 = vst [vmem:[#allocation9 + $0xe0] sm:$0xff] %v1847
      %1880 = vst [vmem:[#allocation9 + $0xe8] sm:$0xff] %v1848
      %1881 = vst [vmem:[#allocation9 + $0xf0] sm:$0xff] %v1849
      %1882 = vst [vmem:[#allocation9 + $0xf8] sm:$0xff] %v1850
    $region53: #{tpu_custom_call.1} parent=1 // pred_fallthru
      _
    // Predicated region
    $region54: #{tpu_custom_call.1} parent=1 // pred_check
      _
    $region55: #{tpu_custom_call.1} parent=1 // pred_check_branch
      %1884 = sbr.rel (0) target = $region57
    $region56: #{tpu_custom_call.1} parent=1 // pred_region
      %s1886 = ssub.s32 4096, 4096
      %1887 = vsyncadd [#allocation5], %s1886
      %s1888 = sshll.u32 [#allocation9], 4
      %s1889 = int_to_ptr.vmem [resolvable:$true] %s1888
      %1894 = dma.vmem_to_hbm [thread:$0]  %s1889, 4096, %s8, [#allocation5], 128, 128, 8
    $region57: #{tpu_custom_call.1} parent=1 // pred_fallthru
      _
    // Predicated region
    $region58: #{tpu_custom_call.1} parent=1 // pred_check
      _
    $region59: #{tpu_custom_call.1} parent=1 // pred_check_branch
      %1896 = sbr.rel (0) target = $region61
    $region60: #{tpu_custom_call.1} parent=1 // pred_region
      %1897 = dma.done [#allocation5], 4096
    $region61: #{tpu_custom_call.1} parent=1 // pred_fallthru
      _
    %1898 = vsyncpa [#allocation4], 1
    %1899 = vsyncpa [#allocation7], 1
    %1900 = vsyncpa [#allocation5], 1

</llo_original>
